<compile_context>
chip_gen: v5e
topology: v5e:2x2
jax: 0.10.0
libtpu: 0.0.40
codegen_flags: <defaults>
</compile_context>

<pallas_src>
import jax
import jax.numpy as jnp
from jax.experimental import pallas as pl
from jax.experimental.pallas import tpu as pltpu  # noqa: F401  (kept for TPU-specific params if scaled up)

# ----------------------------- config -----------------------------
IMG = 32
C_IN = 3
PATCH = 16
N_PATCH = (IMG // PATCH) ** 2          # 4
SEQ = N_PATCH + 1                      # 5 (cls token)
SEQ_PAD = 8                            # pad to one sublane group
HIDDEN = 64
HEADS = 4
HEAD_DIM = HIDDEN // HEADS             # 16
MLP = 128
LAYERS = 2
NUM_CLASSES = 16
NC_PAD = 128                           # lane-dense classifier output slab
LN_EPS = 1e-6                          # torchvision ViT uses eps=1e-6


# ----------------------------- in-kernel helpers -----------------------------
def _ln(x, g, b):
    mu = jnp.mean(x, axis=-1, keepdims=True)
    var = jnp.mean(jnp.square(x - mu), axis=-1, keepdims=True)
    return (x - mu) * jax.lax.rsqrt(var + LN_EPS) * g + b


def _gelu(y):
    # TODO(synk): PyTorch nn.GELU() is exact (erf-based); erf has no guaranteed
    # Mosaic lowering, so the tanh approximation is used inside the kernel.
    c = jnp.float32(0.7978845608028654)  # sqrt(2/pi)
    return 0.5 * y * (1.0 + jnp.tanh(c * (y + 0.044715 * y * y * y)))


# ----------------------------- kernels -----------------------------
def _embed_kernel(p_ref, w_ref, b_ref, cls_ref, pos_ref, o_ref):
    """Patch-embed matmul + cls token + positional add + pad to SEQ_PAD rows."""
    emb = jnp.dot(p_ref[...], w_ref[...],
                  preferred_element_type=jnp.float32) + b_ref[...]   # (B*n, D)
    nb = o_ref.shape[0] // SEQ_PAD
    n = p_ref.shape[0] // nb
    pos = pos_ref[...]                 # (SEQ_PAD, D), pad rows are zero
    cls_row = cls_ref[...]             # (1, D)
    n_pad = SEQ_PAD - 1 - n
    blocks = []
    for b in range(nb):
        tok = emb[b * n:(b + 1) * n, :]
        pieces = [cls_row, tok]
        if n_pad > 0:
            pieces.append(jnp.zeros((n_pad, HIDDEN), jnp.float32))
        blocks.append(jnp.concatenate(pieces, axis=0) + pos)          # (SEQ_PAD, D)
    o_ref[...] = jnp.concatenate(blocks, axis=0)                      # (B*SEQ_PAD, D)


def _encoder_layer_kernel(h_ref, ln1g_ref, ln1b_ref, qkvw_ref, qkvb_ref,
                          outw_ref, outb_ref, ln2g_ref, ln2b_ref,
                          fc1w_ref, fc1b_ref, fc2w_ref, fc2b_ref, o_ref):
    """One full ViT encoder block, fully fused, everything resident in VMEM."""
    x = h_ref[...]                                     # (B*SEQ_PAD, D)
    nb = x.shape[0] // SEQ_PAD

    # ---- y = x + OutProj(MHA(LN1(x))) ----
    y = _ln(x, ln1g_ref[...], ln1b_ref[...])
    qkv = jnp.dot(y, qkvw_ref[...],
                  preferred_element_type=jnp.float32) + qkvb_ref[...]  # (B*SP, 3D)
    q = qkv[:, 0:HIDDEN]
    k = qkv[:, HIDDEN:2 * HIDDEN]
    v = qkv[:, 2 * HIDDEN:3 * HIDDEN]

    scale = jnp.float32(1.0 / (HEAD_DIM ** 0.5))
    # mask out padded key positions (>= SEQ) once; hoisted constant
    kmask = jax.lax.broadcasted_iota(jnp.int32, (SEQ_PAD, SEQ_PAD), 1) < SEQ
    neg = jnp.float32(-1e30)

    batch_out = []
    for b in range(nb):                                # statically unrolled
        r0 = b * SEQ_PAD
        heads = []
        for hd in range(HEADS):                        # statically unrolled
            c0 = hd * HEAD_DIM
            qh = q[r0:r0 + SEQ_PAD, c0:c0 + HEAD_DIM]
            kh = k[r0:r0 + SEQ_PAD, c0:c0 + HEAD_DIM]
            vh = v[r0:r0 + SEQ_PAD, c0:c0 + HEAD_DIM]
            s = jax.lax.dot_general(qh, kh, (((1,), (1,)), ((), ())),
                                    preferred_element_type=jnp.float32) * scale
            s = jnp.where(kmask, s, neg)
            m = jnp.max(s, axis=-1, keepdims=True)
            p = jnp.exp(s - m)
            # softmax denominator via EUP approximate reciprocal (frees VPU slot)
            p = p * pl.reciprocal(jnp.sum(p, axis=-1, keepdims=True), approx=True)
            heads.append(jnp.dot(p, vh, preferred_element_type=jnp.float32))
        batch_out.append(jnp.concatenate(heads, axis=-1))             # (SP, D)
    attn = jnp.concatenate(batch_out, axis=0)                          # (B*SP, D)

    h1 = x + jnp.dot(attn, outw_ref[...],
                     preferred_element_type=jnp.float32) + outb_ref[...]

    # ---- z = h1 + FC2(GELU(FC1(LN2(h1)))) ----
    y2 = _ln(h1, ln2g_ref[...], ln2b_ref[...])
    u = jnp.dot(y2, fc1w_ref[...],
                preferred_element_type=jnp.float32) + fc1b_ref[...]
    u = _gelu(u)
    o_ref[...] = h1 + jnp.dot(u, fc2w_ref[...],
                              preferred_element_type=jnp.float32) + fc2b_ref[...]


def _head_logits(h_ref, lng_ref, lnb_ref, hw_ref, hb_ref, nb):
    x = h_ref[...]
    # gather the cls rows (row 0 of each batch block) with static slices
    cls = jnp.concatenate(
        [x[b * SEQ_PAD:b * SEQ_PAD + 1, :] for b in range(nb)], axis=0)   # (B, D)
    y = _ln(cls, lng_ref[...], lnb_ref[...])
    logits = jnp.dot(y, hw_ref[...],
                     preferred_element_type=jnp.float32) + hb_ref[...]    # (B, NC_PAD)
    mask = jax.lax.broadcasted_iota(jnp.int32, logits.shape, 1) < NUM_CLASSES
    return jnp.where(mask, logits, jnp.float32(-1e30))


def _head_kernel(h_ref, lng_ref, lnb_ref, hw_ref, hb_ref, o_ref):
    o_ref[...] = _head_logits(h_ref, lng_ref, lnb_ref, hw_ref, hb_ref, o_ref.shape[0])


def _head_softmax_kernel(h_ref, lng_ref, lnb_ref, hw_ref, hb_ref, o_ref):
    logits = _head_logits(h_ref, lng_ref, lnb_ref, hw_ref, hb_ref, o_ref.shape[0])
    m = jnp.max(logits, axis=-1, keepdims=True)
    e = jnp.exp(logits - m)
    # exact divide here (once, tiny) so class probabilities sum to 1 tightly
    o_ref[...] = e / jnp.sum(e, axis=-1, keepdims=True)


# ----------------------------- wrappers -----------------------------
def embed(patches, params, batch):
    return pl.pallas_call(
        _embed_kernel,
        out_shape=jax.ShapeDtypeStruct((batch * SEQ_PAD, HIDDEN), jnp.float32),
    )(patches, params["conv_w"], params["conv_b"].reshape(1, HIDDEN),
      params["cls"], params["pos"])


def encoder_layer(h, lyr):
    M, D = h.shape
    return pl.pallas_call(
        _encoder_layer_kernel,
        out_shape=jax.ShapeDtypeStruct((M, D), jnp.float32),
    )(h,
      lyr["ln1_g"].reshape(1, D), lyr["ln1_b"].reshape(1, D),
      lyr["qkv_w"], lyr["qkv_b"].reshape(1, 3 * HIDDEN),
      lyr["out_w"], lyr["out_b"].reshape(1, HIDDEN),
      lyr["ln2_g"].reshape(1, D), lyr["ln2_b"].reshape(1, D),
      lyr["fc1_w"], lyr["fc1_b"].reshape(1, MLP),
      lyr["fc2_w"], lyr["fc2_b"].reshape(1, HIDDEN))


def head(h, params, batch, softmax_out):
    kern = _head_softmax_kernel if softmax_out else _head_kernel
    out = pl.pallas_call(
        kern,
        out_shape=jax.ShapeDtypeStruct((batch, NC_PAD), jnp.float32),
    )(h, params["ln_g"].reshape(1, HIDDEN), params["ln_b"].reshape(1, HIDDEN),
      params["head_w"], params["head_b"].reshape(1, NC_PAD))
    return out[:, :NUM_CLASSES]       # slice the lane-padded slab outside


# ----------------------------- params -----------------------------
def init_params(key):
    # Deterministic synthetic init (the module normally loads ViT_B_16 weights;
    # here weights are drawn from PRNGKey-seeded normals).
    ks = iter(jax.random.split(key, 16 + 12 * LAYERS))

    def nrm(shape, scale=0.02):
        return (scale * jax.random.normal(next(ks), shape)).astype(jnp.float32)

    ones = lambda s: jnp.ones(s, jnp.float32)
    zeros = lambda s: jnp.zeros(s, jnp.float32)

    pos_real = nrm((SEQ, HIDDEN))
    pos = jnp.zeros((SEQ_PAD, HIDDEN), jnp.float32).at[:SEQ].set(pos_real)

    head_w_real = nrm((HIDDEN, NUM_CLASSES))
    head_w = jnp.zeros((HIDDEN, NC_PAD), jnp.float32).at[:, :NUM_CLASSES].set(head_w_real)

    p = {
        # conv_proj (Conv2d k=16, s=16) stored as (C*P*P, HIDDEN) matmul weight
        "conv_w": nrm((C_IN * PATCH * PATCH, HIDDEN)),
        "conv_b": nrm((HIDDEN,)),
        "cls": nrm((1, HIDDEN)),
        "pos": pos,                               # (SEQ_PAD, HIDDEN), pad rows zero
        "ln_g": ones((HIDDEN,)), "ln_b": zeros((HIDDEN,)),
        "head_w": head_w,                         # lane-padded to NC_PAD
        "head_b": zeros((NC_PAD,)),
        "layers": [],
    }
    for _ in range(LAYERS):
        p["layers"].append({
            "ln1_g": ones((HIDDEN,)), "ln1_b": zeros((HIDDEN,)),
            "qkv_w": nrm((HIDDEN, 3 * HIDDEN)), "qkv_b": zeros((3 * HIDDEN,)),
            "out_w": nrm((HIDDEN, HIDDEN)), "out_b": zeros((HIDDEN,)),
            "ln2_g": ones((HIDDEN,)), "ln2_b": zeros((HIDDEN,)),
            "fc1_w": nrm((HIDDEN, MLP)), "fc1_b": zeros((MLP,)),
            "fc2_w": nrm((MLP, HIDDEN)), "fc2_b": zeros((HIDDEN,)),
        })
    return p


# ----------------------------- forward -----------------------------
def vit_forward(params, x, softmax_out=True):
    B, C, H, W = x.shape
    gh, gw = H // PATCH, W // PATCH
    n = gh * gw

    # Patchify (plain-JAX glue on the raw image only): (B,C,H,W) -> (B*n, C*P*P),
    # flatten order (C, ph, pw) matches the flattened torch Conv2d weight.
    patches = x.reshape(B, C, gh, PATCH, gw, PATCH)
    patches = patches.transpose(0, 2, 4, 1, 3, 5).reshape(B * n, C * PATCH * PATCH)

    # 1) Fused patch embedding + cls token + pos add + seq padding.
    h = embed(patches, params, B)                       # (B*SEQ_PAD, HIDDEN)

    # 2) Fused encoder layers (one pallas_call each).
    for lyr in params["layers"]:
        h = encoder_layer(h, lyr)

    # 3) Fused tail: final LN -> cls token -> classifier head -> softmax.
    return head(h, params, B, softmax_out)              # (B, NUM_CLASSES)


# ----------------------------- main -----------------------------
if __name__ == "__main__":
    key = jax.random.PRNGKey(0)
    kx, kp = jax.random.split(key)
    x = jax.random.normal(kx, (2, C_IN, IMG, IMG), dtype=jnp.float32)
    params = init_params(kp)

    fwd = jax.jit(lambda p, xx: vit_forward(p, xx, softmax_out=True))
    out = fwd(params, x)
    out = jax.block_until_ready(out)

    assert out.shape == (2, NUM_CLASSES), out.shape
    assert bool(jnp.all(jnp.isfinite(out)))
    # softmax rows should sum to ~1
    assert bool(jnp.allclose(jnp.sum(out, axis=1), 1.0, atol=1e-4))
    print("KERNEL_OK")
</pallas_src>

<mosaic_0001>
module attributes {stable_mosaic.version = 11 : i64} {
  func.func @_embed_kernel(%arg0: memref<8x768xf32, #tpu.memory_space<vmem>>, %arg1: memref<768x64xf32, #tpu.memory_space<vmem>>, %arg2: memref<1x64xf32, #tpu.memory_space<vmem>>, %arg3: memref<1x64xf32, #tpu.memory_space<vmem>>, %arg4: memref<8x64xf32, #tpu.memory_space<vmem>>, %arg5: memref<16x64xf32, #tpu.memory_space<vmem>>) attributes {dimension_semantics = [], scalar_prefetch = 0 : i64, scratch_operands = 0 : i64, tpu.core_type = #tpu.core_type<tc>} {
    %c0 = arith.constant 0 : index
    %c0_0 = arith.constant 0 : index
    %0 = vector.load %arg0[%c0, %c0_0] : memref<8x768xf32, #tpu.memory_space<vmem>>, vector<8x768xf32>
    %c0_1 = arith.constant 0 : index
    %c0_2 = arith.constant 0 : index
    %1 = vector.load %arg1[%c0_1, %c0_2] : memref<768x64xf32, #tpu.memory_space<vmem>>, vector<768x64xf32>
    %cst = arith.constant dense<0.000000e+00> : vector<8x64xf32>
    %2 = tpu.matmul %0, %1, %cst {dimension_numbers = #tpu.dot_dimension_numbers<[1], [0], [0], [1], [0, 0, 1, 1], [], []>} : vector<8x768xf32>, vector<768x64xf32>, vector<8x64xf32> -> vector<8x64xf32>
    %c0_3 = arith.constant 0 : index
    %c0_4 = arith.constant 0 : index
    %3 = vector.load %arg2[%c0_3, %c0_4] : memref<1x64xf32, #tpu.memory_space<vmem>>, vector<1x64xf32>
    %4 = vector.broadcast %3 : vector<1x64xf32> to vector<8x64xf32>
    %5 = arith.addf %2, %4 : vector<8x64xf32>
    %c0_5 = arith.constant 0 : index
    %c0_6 = arith.constant 0 : index
    %6 = vector.load %arg4[%c0_5, %c0_6] : memref<8x64xf32, #tpu.memory_space<vmem>>, vector<8x64xf32>
    %c0_7 = arith.constant 0 : index
    %c0_8 = arith.constant 0 : index
    %7 = vector.load %arg3[%c0_7, %c0_8] : memref<1x64xf32, #tpu.memory_space<vmem>>, vector<1x64xf32>
    %8 = vector.extract_strided_slice %5 {offsets = [0, 0], sizes = [4, 64], strides = [1, 1]} : vector<8x64xf32> to vector<4x64xf32>
    %cst_9 = arith.constant 0.000000e+00 : f32
    %9 = vector.broadcast %cst_9 : f32 to vector<3x64xf32>
    %10 = tpu.concatenate %7, %8, %9 in 0 : vector<1x64xf32>, vector<4x64xf32>, vector<3x64xf32> -> vector<8x64xf32>
    %11 = arith.addf %10, %6 : vector<8x64xf32>
    %12 = vector.extract_strided_slice %5 {offsets = [4, 0], sizes = [4, 64], strides = [1, 1]} : vector<8x64xf32> to vector<4x64xf32>
    %cst_10 = arith.constant 0.000000e+00 : f32
    %13 = vector.broadcast %cst_10 : f32 to vector<3x64xf32>
    %14 = tpu.concatenate %7, %12, %13 in 0 : vector<1x64xf32>, vector<4x64xf32>, vector<3x64xf32> -> vector<8x64xf32>
    %15 = arith.addf %14, %6 : vector<8x64xf32>
    %16 = tpu.concatenate %11, %15 in 0 : vector<8x64xf32>, vector<8x64xf32> -> vector<16x64xf32>
    %c0_11 = arith.constant 0 : index
    %c0_12 = arith.constant 0 : index
    %17 = vector.load %arg5[%c0_11, %c0_12] : memref<16x64xf32, #tpu.memory_space<vmem>>, vector<16x64xf32>
    tpu.vector_store %arg5[%c0_11, %c0_12], %16 {strides = array<i32>} : memref<16x64xf32, #tpu.memory_space<vmem>>, vector<16x64xf32>,
    return
  }
}

module attributes {stable_mosaic.version = 11 : i64} {
  func.func @_head_softmax_kernel(%arg0: memref<16x64xf32, #tpu.memory_space<vmem>>, %arg1: memref<1x64xf32, #tpu.memory_space<vmem>>, %arg2: memref<1x64xf32, #tpu.memory_space<vmem>>, %arg3: memref<64x128xf32, #tpu.memory_space<vmem>>, %arg4: memref<1x128xf32, #tpu.memory_space<vmem>>, %arg5: memref<2x128xf32, #tpu.memory_space<vmem>>) attributes {dimension_semantics = [], scalar_prefetch = 0 : i64, scratch_operands = 0 : i64, tpu.core_type = #tpu.core_type<tc>} {
    %c0 = arith.constant 0 : index
    %c0_0 = arith.constant 0 : index
    %0 = vector.load %arg0[%c0, %c0_0] : memref<16x64xf32, #tpu.memory_space<vmem>>, vector<16x64xf32>
    %1 = vector.extract_strided_slice %0 {offsets = [0, 0], sizes = [1, 64], strides = [1, 1]} : vector<16x64xf32> to vector<1x64xf32>
    %2 = vector.extract_strided_slice %0 {offsets = [8, 0], sizes = [1, 64], strides = [1, 1]} : vector<16x64xf32> to vector<1x64xf32>
    %3 = tpu.concatenate %1, %2 in 0 : vector<1x64xf32>, vector<1x64xf32> -> vector<2x64xf32>
    %c0_1 = arith.constant 0 : index
    %c0_2 = arith.constant 0 : index
    %4 = vector.load %arg1[%c0_1, %c0_2] : memref<1x64xf32, #tpu.memory_space<vmem>>, vector<1x64xf32>
    %c0_3 = arith.constant 0 : index
    %c0_4 = arith.constant 0 : index
    %5 = vector.load %arg2[%c0_3, %c0_4] : memref<1x64xf32, #tpu.memory_space<vmem>>, vector<1x64xf32>
    %cst = arith.constant dense<0.000000e+00> : vector<2xf32>
    %6 = vector.multi_reduction <add>, %3, %cst [1] : vector<2x64xf32> to vector<2xf32>
    %7 = vector.shape_cast %6 : vector<2xf32> to vector<2x1xf32>
    %cst_5 = arith.constant 6.400000e+01 : f32
    %8 = vector.broadcast %cst_5 : f32 to vector<2x1xf32>
    %9 = arith.divf %7, %8 : vector<2x1xf32>
    %10 = vector.broadcast %9 : vector<2x1xf32> to vector<2x64xf32>
    %11 = arith.subf %3, %10 : vector<2x64xf32>
    %12 = arith.mulf %11, %11 : vector<2x64xf32>
    %cst_6 = arith.constant dense<0.000000e+00> : vector<2xf32>
    %13 = vector.multi_reduction <add>, %12, %cst_6 [1] : vector<2x64xf32> to vector<2xf32>
    %14 = vector.shape_cast %13 : vector<2xf32> to vector<2x1xf32>
    %cst_7 = arith.constant 6.400000e+01 : f32
    %15 = vector.broadcast %cst_7 : f32 to vector<2x1xf32>
    %16 = arith.divf %14, %15 : vector<2x1xf32>
    %17 = vector.broadcast %9 : vector<2x1xf32> to vector<2x64xf32>
    %18 = arith.subf %3, %17 : vector<2x64xf32>
    %cst_8 = arith.constant 9.99999997E-7 : f32
    %19 = vector.broadcast %cst_8 : f32 to vector<2x1xf32>
    %20 = arith.addf %16, %19 : vector<2x1xf32>
    %21 = math.rsqrt %20 : vector<2x1xf32>
    %22 = vector.broadcast %21 : vector<2x1xf32> to vector<2x64xf32>
    %23 = arith.mulf %18, %22 : vector<2x64xf32>
    %24 = vector.broadcast %4 : vector<1x64xf32> to vector<2x64xf32>
    %25 = arith.mulf %23, %24 : vector<2x64xf32>
    %26 = vector.broadcast %5 : vector<1x64xf32> to vector<2x64xf32>
    %27 = arith.addf %25, %26 : vector<2x64xf32>
    %c0_9 = arith.constant 0 : index
    %c0_10 = arith.constant 0 : index
    %28 = vector.load %arg3[%c0_9, %c0_10] : memref<64x128xf32, #tpu.memory_space<vmem>>, vector<64x128xf32>
    %cst_11 = arith.constant dense<0.000000e+00> : vector<2x128xf32>
    %29 = tpu.matmul %27, %28, %cst_11 {dimension_numbers = #tpu.dot_dimension_numbers<[1], [0], [0], [1], [0, 0, 1, 1], [], []>} : vector<2x64xf32>, vector<64x128xf32>, vector<2x128xf32> -> vector<2x128xf32>
    %c0_12 = arith.constant 0 : index
    %c0_13 = arith.constant 0 : index
    %30 = vector.load %arg4[%c0_12, %c0_13] : memref<1x128xf32, #tpu.memory_space<vmem>>, vector<1x128xf32>
    %31 = vector.broadcast %30 : vector<1x128xf32> to vector<2x128xf32>
    %32 = arith.addf %29, %31 : vector<2x128xf32>
    %33 = tpu.iota {dimensions = array<i32: 1>} : vector<2x128xi32>
    %c16_i32 = arith.constant 16 : i32
    %34 = vector.broadcast %c16_i32 : i32 to vector<2x128xi32>
    %35 = arith.cmpi slt, %33, %34 : vector<2x128xi32>
    %cst_14 = arith.constant -1.000000e+30 : f32
    %36 = vector.broadcast %cst_14 : f32 to vector<2x128xf32>
    %37 = arith.select %35, %32, %36 : vector<2x128xi1>, vector<2x128xf32>
    %cst_15 = arith.constant dense<0xFF800000> : vector<2xf32>
    %38 = vector.multi_reduction <maximumf>, %37, %cst_15 [1] : vector<2x128xf32> to vector<2xf32>
    %39 = vector.shape_cast %38 : vector<2xf32> to vector<2x1xf32>
    %40 = vector.broadcast %39 : vector<2x1xf32> to vector<2x128xf32>
    %41 = arith.subf %37, %40 : vector<2x128xf32>
    %42 = math.exp %41 : vector<2x128xf32>
    %cst_16 = arith.constant dense<0.000000e+00> : vector<2xf32>
    %43 = vector.multi_reduction <add>, %42, %cst_16 [1] : vector<2x128xf32> to vector<2xf32>
    %44 = vector.shape_cast %43 : vector<2xf32> to vector<2x1xf32>
    %45 = vector.broadcast %44 : vector<2x1xf32> to vector<2x128xf32>
    %46 = arith.divf %42, %45 : vector<2x128xf32>
    %c0_17 = arith.constant 0 : index
    %c0_18 = arith.constant 0 : index
    %47 = vector.load %arg5[%c0_17, %c0_18] : memref<2x128xf32, #tpu.memory_space<vmem>>, vector<2x128xf32>
    tpu.vector_store %arg5[%c0_17, %c0_18], %46 {strides = array<i32>} : memref<2x128xf32, #tpu.memory_space<vmem>>, vector<2x128xf32>,
    return
  }
}

module attributes {stable_mosaic.version = 11 : i64} {
  func.func @_encoder_layer_kernel(%arg0: memref<16x64xf32, #tpu.memory_space<vmem>>, %arg1: memref<1x64xf32, #tpu.memory_space<vmem>>, %arg2: memref<1x64xf32, #tpu.memory_space<vmem>>, %arg3: memref<64x192xf32, #tpu.memory_space<vmem>>, %arg4: memref<1x192xf32, #tpu.memory_space<vmem>>, %arg5: memref<64x64xf32, #tpu.memory_space<vmem>>, %arg6: memref<1x64xf32, #tpu.memory_space<vmem>>, %arg7: memref<1x64xf32, #tpu.memory_space<vmem>>, %arg8: memref<1x64xf32, #tpu.memory_space<vmem>>, %arg9: memref<64x128xf32, #tpu.memory_space<vmem>>, %arg10: memref<1x128xf32, #tpu.memory_space<vmem>>, %arg11: memref<128x64xf32, #tpu.memory_space<vmem>>, %arg12: memref<1x64xf32, #tpu.memory_space<vmem>>, %arg13: memref<16x64xf32, #tpu.memory_space<vmem>>) attributes {dimension_semantics = [], scalar_prefetch = 0 : i64, scratch_operands = 0 : i64, tpu.core_type = #tpu.core_type<tc>} {
    %c0 = arith.constant 0 : index
    %c0_0 = arith.constant 0 : index
    %0 = vector.load %arg0[%c0, %c0_0] : memref<16x64xf32, #tpu.memory_space<vmem>>, vector<16x64xf32>
    %c0_1 = arith.constant 0 : index
    %c0_2 = arith.constant 0 : index
    %1 = vector.load %arg1[%c0_1, %c0_2] : memref<1x64xf32, #tpu.memory_space<vmem>>, vector<1x64xf32>
    %c0_3 = arith.constant 0 : index
    %c0_4 = arith.constant 0 : index
    %2 = vector.load %arg2[%c0_3, %c0_4] : memref<1x64xf32, #tpu.memory_space<vmem>>, vector<1x64xf32>
    %cst = arith.constant dense<0.000000e+00> : vector<16xf32>
    %3 = vector.multi_reduction <add>, %0, %cst [1] : vector<16x64xf32> to vector<16xf32>
    %4 = vector.shape_cast %3 : vector<16xf32> to vector<16x1xf32>
    %cst_5 = arith.constant 6.400000e+01 : f32
    %5 = vector.broadcast %cst_5 : f32 to vector<16x1xf32>
    %6 = arith.divf %4, %5 : vector<16x1xf32>
    %7 = vector.broadcast %6 : vector<16x1xf32> to vector<16x64xf32>
    %8 = arith.subf %0, %7 : vector<16x64xf32>
    %9 = arith.mulf %8, %8 : vector<16x64xf32>
    %cst_6 = arith.constant dense<0.000000e+00> : vector<16xf32>
    %10 = vector.multi_reduction <add>, %9, %cst_6 [1] : vector<16x64xf32> to vector<16xf32>
    %11 = vector.shape_cast %10 : vector<16xf32> to vector<16x1xf32>
    %cst_7 = arith.constant 6.400000e+01 : f32
    %12 = vector.broadcast %cst_7 : f32 to vector<16x1xf32>
    %13 = arith.divf %11, %12 : vector<16x1xf32>
    %14 = vector.broadcast %6 : vector<16x1xf32> to vector<16x64xf32>
    %15 = arith.subf %0, %14 : vector<16x64xf32>
    %cst_8 = arith.constant 9.99999997E-7 : f32
    %16 = vector.broadcast %cst_8 : f32 to vector<16x1xf32>
    %17 = arith.addf %13, %16 : vector<16x1xf32>
    %18 = math.rsqrt %17 : vector<16x1xf32>
    %19 = vector.broadcast %18 : vector<16x1xf32> to vector<16x64xf32>
    %20 = arith.mulf %15, %19 : vector<16x64xf32>
    %21 = vector.broadcast %1 : vector<1x64xf32> to vector<16x64xf32>
    %22 = arith.mulf %20, %21 : vector<16x64xf32>
    %23 = vector.broadcast %2 : vector<1x64xf32> to vector<16x64xf32>
    %24 = arith.addf %22, %23 : vector<16x64xf32>
    %c0_9 = arith.constant 0 : index
    %c0_10 = arith.constant 0 : index
    %25 = vector.load %arg3[%c0_9, %c0_10] : memref<64x192xf32, #tpu.memory_space<vmem>>, vector<64x192xf32>
    %cst_11 = arith.constant dense<0.000000e+00> : vector<16x192xf32>
    %26 = tpu.matmul %24, %25, %cst_11 {dimension_numbers = #tpu.dot_dimension_numbers<[1], [0], [0], [1], [0, 0, 1, 1], [], []>} : vector<16x64xf32>, vector<64x192xf32>, vector<16x192xf32> -> vector<16x192xf32>
    %c0_12 = arith.constant 0 : index
    %c0_13 = arith.constant 0 : index
    %27 = vector.load %arg4[%c0_12, %c0_13] : memref<1x192xf32, #tpu.memory_space<vmem>>, vector<1x192xf32>
    %28 = vector.broadcast %27 : vector<1x192xf32> to vector<16x192xf32>
    %29 = arith.addf %26, %28 : vector<16x192xf32>
    %30 = vector.extract_strided_slice %29 {offsets = [0, 0], sizes = [16, 64], strides = [1, 1]} : vector<16x192xf32> to vector<16x64xf32>
    %31 = vector.extract_strided_slice %29 {offsets = [0, 64], sizes = [16, 64], strides = [1, 1]} : vector<16x192xf32> to vector<16x64xf32>
    %32 = vector.extract_strided_slice %29 {offsets = [0, 128], sizes = [16, 64], strides = [1, 1]} : vector<16x192xf32> to vector<16x64xf32>
    %33 = tpu.iota {dimensions = array<i32: 1>} : vector<8x8xi32>
    %c5_i32 = arith.constant 5 : i32
    %34 = vector.broadcast %c5_i32 : i32 to vector<8x8xi32>
    %35 = arith.cmpi slt, %33, %34 : vector<8x8xi32>
    %36 = vector.extract_strided_slice %30 {offsets = [0, 0], sizes = [8, 16], strides = [1, 1]} : vector<16x64xf32> to vector<8x16xf32>
    %37 = vector.extract_strided_slice %31 {offsets = [0, 0], sizes = [8, 16], strides = [1, 1]} : vector<16x64xf32> to vector<8x16xf32>
    %38 = vector.extract_strided_slice %32 {offsets = [0, 0], sizes = [8, 16], strides = [1, 1]} : vector<16x64xf32> to vector<8x16xf32>
    %cst_14 = arith.constant dense<0.000000e+00> : vector<8x8xf32>
    %39 = tpu.matmul %36, %37, %cst_14 {dimension_numbers = #tpu.dot_dimension_numbers<[1], [1], [0], [0], [0, 0, 1, 0], [], []>} : vector<8x16xf32>, vector<8x16xf32>, vector<8x8xf32> -> vector<8x8xf32>
    %cst_15 = arith.constant 2.500000e-01 : f32
    %40 = vector.broadcast %cst_15 : f32 to vector<8x8xf32>
    %41 = arith.mulf %39, %40 : vector<8x8xf32>
    %cst_16 = arith.constant -1.000000e+30 : f32
    %42 = vector.broadcast %cst_16 : f32 to vector<8x8xf32>
    %43 = arith.select %35, %41, %42 : vector<8x8xi1>, vector<8x8xf32>
    %cst_17 = arith.constant dense<0xFF800000> : vector<8xf32>
    %44 = vector.multi_reduction <maximumf>, %43, %cst_17 [1] : vector<8x8xf32> to vector<8xf32>
    %45 = vector.shape_cast %44 : vector<8xf32> to vector<8x1xf32>
    %46 = vector.broadcast %45 : vector<8x1xf32> to vector<8x8xf32>
    %47 = arith.subf %43, %46 : vector<8x8xf32>
    %48 = math.exp %47 : vector<8x8xf32>
    %cst_18 = arith.constant dense<0.000000e+00> : vector<8xf32>
    %49 = vector.multi_reduction <add>, %48, %cst_18 [1] : vector<8x8xf32> to vector<8xf32>
    %50 = vector.shape_cast %49 : vector<8xf32> to vector<8x1xf32>
    %51 = tpu.reciprocal %50 {approx = true} : vector<8x1xf32> -> vector<8x1xf32>
    %52 = vector.broadcast %51 : vector<8x1xf32> to vector<8x8xf32>
    %53 = arith.mulf %48, %52 : vector<8x8xf32>
    %cst_19 = arith.constant dense<0.000000e+00> : vector<8x16xf32>
    %54 = tpu.matmul %53, %38, %cst_19 {dimension_numbers = #tpu.dot_dimension_numbers<[1], [0], [0], [1], [0, 0, 1, 1], [], []>} : vector<8x8xf32>, vector<8x16xf32>, vector<8x16xf32> -> vector<8x16xf32>
    %55 = vector.extract_strided_slice %30 {offsets = [0, 16], sizes = [8, 16], strides = [1, 1]} : vector<16x64xf32> to vector<8x16xf32>
    %56 = vector.extract_strided_slice %31 {offsets = [0, 16], sizes = [8, 16], strides = [1, 1]} : vector<16x64xf32> to vector<8x16xf32>
    %57 = vector.extract_strided_slice %32 {offsets = [0, 16], sizes = [8, 16], strides = [1, 1]} : vector<16x64xf32> to vector<8x16xf32>
    %cst_20 = arith.constant dense<0.000000e+00> : vector<8x8xf32>
    %58 = tpu.matmul %55, %56, %cst_20 {dimension_numbers = #tpu.dot_dimension_numbers<[1], [1], [0], [0], [0, 0, 1, 0], [], []>} : vector<8x16xf32>, vector<8x16xf32>, vector<8x8xf32> -> vector<8x8xf32>
    %cst_21 = arith.constant 2.500000e-01 : f32
    %59 = vector.broadcast %cst_21 : f32 to vector<8x8xf32>
    %60 = arith.mulf %58, %59 : vector<8x8xf32>
    %cst_22 = arith.constant -1.000000e+30 : f32
    %61 = vector.broadcast %cst_22 : f32 to vector<8x8xf32>
    %62 = arith.select %35, %60, %61 : vector<8x8xi1>, vector<8x8xf32>
    %cst_23 = arith.constant dense<0xFF800000> : vector<8xf32>
    %63 = vector.multi_reduction <maximumf>, %62, %cst_23 [1] : vector<8x8xf32> to vector<8xf32>
    %64 = vector.shape_cast %63 : vector<8xf32> to vector<8x1xf32>
    %65 = vector.broadcast %64 : vector<8x1xf32> to vector<8x8xf32>
    %66 = arith.subf %62, %65 : vector<8x8xf32>
    %67 = math.exp %66 : vector<8x8xf32>
    %cst_24 = arith.constant dense<0.000000e+00> : vector<8xf32>
    %68 = vector.multi_reduction <add>, %67, %cst_24 [1] : vector<8x8xf32> to vector<8xf32>
    %69 = vector.shape_cast %68 : vector<8xf32> to vector<8x1xf32>
    %70 = tpu.reciprocal %69 {approx = true} : vector<8x1xf32> -> vector<8x1xf32>
    %71 = vector.broadcast %70 : vector<8x1xf32> to vector<8x8xf32>
    %72 = arith.mulf %67, %71 : vector<8x8xf32>
    %cst_25 = arith.constant dense<0.000000e+00> : vector<8x16xf32>
    %73 = tpu.matmul %72, %57, %cst_25 {dimension_numbers = #tpu.dot_dimension_numbers<[1], [0], [0], [1], [0, 0, 1, 1], [], []>} : vector<8x8xf32>, vector<8x16xf32>, vector<8x16xf32> -> vector<8x16xf32>
    %74 = vector.extract_strided_slice %30 {offsets = [0, 32], sizes = [8, 16], strides = [1, 1]} : vector<16x64xf32> to vector<8x16xf32>
    %75 = vector.extract_strided_slice %31 {offsets = [0, 32], sizes = [8, 16], strides = [1, 1]} : vector<16x64xf32> to vector<8x16xf32>
    %76 = vector.extract_strided_slice %32 {offsets = [0, 32], sizes = [8, 16], strides = [1, 1]} : vector<16x64xf32> to vector<8x16xf32>
    %cst_26 = arith.constant dense<0.000000e+00> : vector<8x8xf32>
    %77 = tpu.matmul %74, %75, %cst_26 {dimension_numbers = #tpu.dot_dimension_numbers<[1], [1], [0], [0], [0, 0, 1, 0], [], []>} : vector<8x16xf32>, vector<8x16xf32>, vector<8x8xf32> -> vector<8x8xf32>
    %cst_27 = arith.constant 2.500000e-01 : f32
    %78 = vector.broadcast %cst_27 : f32 to vector<8x8xf32>
    %79 = arith.mulf %77, %78 : vector<8x8xf32>
    %cst_28 = arith.constant -1.000000e+30 : f32
    %80 = vector.broadcast %cst_28 : f32 to vector<8x8xf32>
    %81 = arith.select %35, %79, %80 : vector<8x8xi1>, vector<8x8xf32>
    %cst_29 = arith.constant dense<0xFF800000> : vector<8xf32>
    %82 = vector.multi_reduction <maximumf>, %81, %cst_29 [1] : vector<8x8xf32> to vector<8xf32>
    %83 = vector.shape_cast %82 : vector<8xf32> to vector<8x1xf32>
    %84 = vector.broadcast %83 : vector<8x1xf32> to vector<8x8xf32>
    %85 = arith.subf %81, %84 : vector<8x8xf32>
    %86 = math.exp %85 : vector<8x8xf32>
    %cst_30 = arith.constant dense<0.000000e+00> : vector<8xf32>
    %87 = vector.multi_reduction <add>, %86, %cst_30 [1] : vector<8x8xf32> to vector<8xf32>
    %88 = vector.shape_cast %87 : vector<8xf32> to vector<8x1xf32>
    %89 = tpu.reciprocal %88 {approx = true} : vector<8x1xf32> -> vector<8x1xf32>
    %90 = vector.broadcast %89 : vector<8x1xf32> to vector<8x8xf32>
    %91 = arith.mulf %86, %90 : vector<8x8xf32>
    %cst_31 = arith.constant dense<0.000000e+00> : vector<8x16xf32>
    %92 = tpu.matmul %91, %76, %cst_31 {dimension_numbers = #tpu.dot_dimension_numbers<[1], [0], [0], [1], [0, 0, 1, 1], [], []>} : vector<8x8xf32>, vector<8x16xf32>, vector<8x16xf32> -> vector<8x16xf32>
    %93 = vector.extract_strided_slice %30 {offsets = [0, 48], sizes = [8, 16], strides = [1, 1]} : vector<16x64xf32> to vector<8x16xf32>
    %94 = vector.extract_strided_slice %31 {offsets = [0, 48], sizes = [8, 16], strides = [1, 1]} : vector<16x64xf32> to vector<8x16xf32>
    %95 = vector.extract_strided_slice %32 {offsets = [0, 48], sizes = [8, 16], strides = [1, 1]} : vector<16x64xf32> to vector<8x16xf32>
    %cst_32 = arith.constant dense<0.000000e+00> : vector<8x8xf32>
    %96 = tpu.matmul %93, %94, %cst_32 {dimension_numbers = #tpu.dot_dimension_numbers<[1], [1], [0], [0], [0, 0, 1, 0], [], []>} : vector<8x16xf32>, vector<8x16xf32>, vector<8x8xf32> -> vector<8x8xf32>
    %cst_33 = arith.constant 2.500000e-01 : f32
    %97 = vector.broadcast %cst_33 : f32 to vector<8x8xf32>
    %98 = arith.mulf %96, %97 : vector<8x8xf32>
    %cst_34 = arith.constant -1.000000e+30 : f32
    %99 = vector.broadcast %cst_34 : f32 to vector<8x8xf32>
    %100 = arith.select %35, %98, %99 : vector<8x8xi1>, vector<8x8xf32>
    %cst_35 = arith.constant dense<0xFF800000> : vector<8xf32>
    %101 = vector.multi_reduction <maximumf>, %100, %cst_35 [1] : vector<8x8xf32> to vector<8xf32>
    %102 = vector.shape_cast %101 : vector<8xf32> to vector<8x1xf32>
    %103 = vector.broadcast %102 : vector<8x1xf32> to vector<8x8xf32>
    %104 = arith.subf %100, %103 : vector<8x8xf32>
    %105 = math.exp %104 : vector<8x8xf32>
    %cst_36 = arith.constant dense<0.000000e+00> : vector<8xf32>
    %106 = vector.multi_reduction <add>, %105, %cst_36 [1] : vector<8x8xf32> to vector<8xf32>
    %107 = vector.shape_cast %106 : vector<8xf32> to vector<8x1xf32>
    %108 = tpu.reciprocal %107 {approx = true} : vector<8x1xf32> -> vector<8x1xf32>
    %109 = vector.broadcast %108 : vector<8x1xf32> to vector<8x8xf32>
    %110 = arith.mulf %105, %109 : vector<8x8xf32>
    %cst_37 = arith.constant dense<0.000000e+00> : vector<8x16xf32>
    %111 = tpu.matmul %110, %95, %cst_37 {dimension_numbers = #tpu.dot_dimension_numbers<[1], [0], [0], [1], [0, 0, 1, 1], [], []>} : vector<8x8xf32>, vector<8x16xf32>, vector<8x16xf32> -> vector<8x16xf32>
    %112 = tpu.concatenate %54, %73, %92, %111 in 1 : vector<8x16xf32>, vector<8x16xf32>, vector<8x16xf32>, vector<8x16xf32> -> vector<8x64xf32>
    %113 = vector.extract_strided_slice %30 {offsets = [8, 0], sizes = [8, 16], strides = [1, 1]} : vector<16x64xf32> to vector<8x16xf32>
    %114 = vector.extract_strided_slice %31 {offsets = [8, 0], sizes = [8, 16], strides = [1, 1]} : vector<16x64xf32> to vector<8x16xf32>
    %115 = vector.extract_strided_slice %32 {offsets = [8, 0], sizes = [8, 16], strides = [1, 1]} : vector<16x64xf32> to vector<8x16xf32>
    %cst_38 = arith.constant dense<0.000000e+00> : vector<8x8xf32>
    %116 = tpu.matmul %113, %114, %cst_38 {dimension_numbers = #tpu.dot_dimension_numbers<[1], [1], [0], [0], [0, 0, 1, 0], [], []>} : vector<8x16xf32>, vector<8x16xf32>, vector<8x8xf32> -> vector<8x8xf32>
    %cst_39 = arith.constant 2.500000e-01 : f32
    %117 = vector.broadcast %cst_39 : f32 to vector<8x8xf32>
    %118 = arith.mulf %116, %117 : vector<8x8xf32>
    %cst_40 = arith.constant -1.000000e+30 : f32
    %119 = vector.broadcast %cst_40 : f32 to vector<8x8xf32>
    %120 = arith.select %35, %118, %119 : vector<8x8xi1>, vector<8x8xf32>
    %cst_41 = arith.constant dense<0xFF800000> : vector<8xf32>
    %121 = vector.multi_reduction <maximumf>, %120, %cst_41 [1] : vector<8x8xf32> to vector<8xf32>
    %122 = vector.shape_cast %121 : vector<8xf32> to vector<8x1xf32>
    %123 = vector.broadcast %122 : vector<8x1xf32> to vector<8x8xf32>
    %124 = arith.subf %120, %123 : vector<8x8xf32>
    %125 = math.exp %124 : vector<8x8xf32>
    %cst_42 = arith.constant dense<0.000000e+00> : vector<8xf32>
    %126 = vector.multi_reduction <add>, %125, %cst_42 [1] : vector<8x8xf32> to vector<8xf32>
    %127 = vector.shape_cast %126 : vector<8xf32> to vector<8x1xf32>
    %128 = tpu.reciprocal %127 {approx = true} : vector<8x1xf32> -> vector<8x1xf32>
    %129 = vector.broadcast %128 : vector<8x1xf32> to vector<8x8xf32>
    %130 = arith.mulf %125, %129 : vector<8x8xf32>
    %cst_43 = arith.constant dense<0.000000e+00> : vector<8x16xf32>
    %131 = tpu.matmul %130, %115, %cst_43 {dimension_numbers = #tpu.dot_dimension_numbers<[1], [0], [0], [1], [0, 0, 1, 1], [], []>} : vector<8x8xf32>, vector<8x16xf32>, vector<8x16xf32> -> vector<8x16xf32>
    %132 = vector.extract_strided_slice %30 {offsets = [8, 16], sizes = [8, 16], strides = [1, 1]} : vector<16x64xf32> to vector<8x16xf32>
    %133 = vector.extract_strided_slice %31 {offsets = [8, 16], sizes = [8, 16], strides = [1, 1]} : vector<16x64xf32> to vector<8x16xf32>
    %134 = vector.extract_strided_slice %32 {offsets = [8, 16], sizes = [8, 16], strides = [1, 1]} : vector<16x64xf32> to vector<8x16xf32>
    %cst_44 = arith.constant dense<0.000000e+00> : vector<8x8xf32>
    %135 = tpu.matmul %132, %133, %cst_44 {dimension_numbers = #tpu.dot_dimension_numbers<[1], [1], [0], [0], [0, 0, 1, 0], [], []>} : vector<8x16xf32>, vector<8x16xf32>, vector<8x8xf32> -> vector<8x8xf32>
    %cst_45 = arith.constant 2.500000e-01 : f32
    %136 = vector.broadcast %cst_45 : f32 to vector<8x8xf32>
    %137 = arith.mulf %135, %136 : vector<8x8xf32>
    %cst_46 = arith.constant -1.000000e+30 : f32
    %138 = vector.broadcast %cst_46 : f32 to vector<8x8xf32>
    %139 = arith.select %35, %137, %138 : vector<8x8xi1>, vector<8x8xf32>
    %cst_47 = arith.constant dense<0xFF800000> : vector<8xf32>
    %140 = vector.multi_reduction <maximumf>, %139, %cst_47 [1] : vector<8x8xf32> to vector<8xf32>
    %141 = vector.shape_cast %140 : vector<8xf32> to vector<8x1xf32>
    %142 = vector.broadcast %141 : vector<8x1xf32> to vector<8x8xf32>
    %143 = arith.subf %139, %142 : vector<8x8xf32>
    %144 = math.exp %143 : vector<8x8xf32>
    %cst_48 = arith.constant dense<0.000000e+00> : vector<8xf32>
    %145 = vector.multi_reduction <add>, %144, %cst_48 [1] : vector<8x8xf32> to vector<8xf32>
    %146 = vector.shape_cast %145 : vector<8xf32> to vector<8x1xf32>
    %147 = tpu.reciprocal %146 {approx = true} : vector<8x1xf32> -> vector<8x1xf32>
    %148 = vector.broadcast %147 : vector<8x1xf32> to vector<8x8xf32>
    %149 = arith.mulf %144, %148 : vector<8x8xf32>
    %cst_49 = arith.constant dense<0.000000e+00> : vector<8x16xf32>
    %150 = tpu.matmul %149, %134, %cst_49 {dimension_numbers = #tpu.dot_dimension_numbers<[1], [0], [0], [1], [0, 0, 1, 1], [], []>} : vector<8x8xf32>, vector<8x16xf32>, vector<8x16xf32> -> vector<8x16xf32>
    %151 = vector.extract_strided_slice %30 {offsets = [8, 32], sizes = [8, 16], strides = [1, 1]} : vector<16x64xf32> to vector<8x16xf32>
    %152 = vector.extract_strided_slice %31 {offsets = [8, 32], sizes = [8, 16], strides = [1, 1]} : vector<16x64xf32> to vector<8x16xf32>
    %153 = vector.extract_strided_slice %32 {offsets = [8, 32], sizes = [8, 16], strides = [1, 1]} : vector<16x64xf32> to vector<8x16xf32>
    %cst_50 = arith.constant dense<0.000000e+00> : vector<8x8xf32>
    %154 = tpu.matmul %151, %152, %cst_50 {dimension_numbers = #tpu.dot_dimension_numbers<[1], [1], [0], [0], [0, 0, 1, 0], [], []>} : vector<8x16xf32>, vector<8x16xf32>, vector<8x8xf32> -> vector<8x8xf32>
    %cst_51 = arith.constant 2.500000e-01 : f32
    %155 = vector.broadcast %cst_51 : f32 to vector<8x8xf32>
    %156 = arith.mulf %154, %155 : vector<8x8xf32>
    %cst_52 = arith.constant -1.000000e+30 : f32
    %157 = vector.broadcast %cst_52 : f32 to vector<8x8xf32>
    %158 = arith.select %35, %156, %157 : vector<8x8xi1>, vector<8x8xf32>
    %cst_53 = arith.constant dense<0xFF800000> : vector<8xf32>
    %159 = vector.multi_reduction <maximumf>, %158, %cst_53 [1] : vector<8x8xf32> to vector<8xf32>
    %160 = vector.shape_cast %159 : vector<8xf32> to vector<8x1xf32>
    %161 = vector.broadcast %160 : vector<8x1xf32> to vector<8x8xf32>
    %162 = arith.subf %158, %161 : vector<8x8xf32>
    %163 = math.exp %162 : vector<8x8xf32>
    %cst_54 = arith.constant dense<0.000000e+00> : vector<8xf32>
    %164 = vector.multi_reduction <add>, %163, %cst_54 [1] : vector<8x8xf32> to vector<8xf32>
    %165 = vector.shape_cast %164 : vector<8xf32> to vector<8x1xf32>
    %166 = tpu.reciprocal %165 {approx = true} : vector<8x1xf32> -> vector<8x1xf32>
    %167 = vector.broadcast %166 : vector<8x1xf32> to vector<8x8xf32>
    %168 = arith.mulf %163, %167 : vector<8x8xf32>
    %cst_55 = arith.constant dense<0.000000e+00> : vector<8x16xf32>
    %169 = tpu.matmul %168, %153, %cst_55 {dimension_numbers = #tpu.dot_dimension_numbers<[1], [0], [0], [1], [0, 0, 1, 1], [], []>} : vector<8x8xf32>, vector<8x16xf32>, vector<8x16xf32> -> vector<8x16xf32>
    %170 = vector.extract_strided_slice %30 {offsets = [8, 48], sizes = [8, 16], strides = [1, 1]} : vector<16x64xf32> to vector<8x16xf32>
    %171 = vector.extract_strided_slice %31 {offsets = [8, 48], sizes = [8, 16], strides = [1, 1]} : vector<16x64xf32> to vector<8x16xf32>
    %172 = vector.extract_strided_slice %32 {offsets = [8, 48], sizes = [8, 16], strides = [1, 1]} : vector<16x64xf32> to vector<8x16xf32>
    %cst_56 = arith.constant dense<0.000000e+00> : vector<8x8xf32>
    %173 = tpu.matmul %170, %171, %cst_56 {dimension_numbers = #tpu.dot_dimension_numbers<[1], [1], [0], [0], [0, 0, 1, 0], [], []>} : vector<8x16xf32>, vector<8x16xf32>, vector<8x8xf32> -> vector<8x8xf32>
    %cst_57 = arith.constant 2.500000e-01 : f32
    %174 = vector.broadcast %cst_57 : f32 to vector<8x8xf32>
    %175 = arith.mulf %173, %174 : vector<8x8xf32>
    %cst_58 = arith.constant -1.000000e+30 : f32
    %176 = vector.broadcast %cst_58 : f32 to vector<8x8xf32>
    %177 = arith.select %35, %175, %176 : vector<8x8xi1>, vector<8x8xf32>
    %cst_59 = arith.constant dense<0xFF800000> : vector<8xf32>
    %178 = vector.multi_reduction <maximumf>, %177, %cst_59 [1] : vector<8x8xf32> to vector<8xf32>
    %179 = vector.shape_cast %178 : vector<8xf32> to vector<8x1xf32>
    %180 = vector.broadcast %179 : vector<8x1xf32> to vector<8x8xf32>
    %181 = arith.subf %177, %180 : vector<8x8xf32>
    %182 = math.exp %181 : vector<8x8xf32>
    %cst_60 = arith.constant dense<0.000000e+00> : vector<8xf32>
    %183 = vector.multi_reduction <add>, %182, %cst_60 [1] : vector<8x8xf32> to vector<8xf32>
    %184 = vector.shape_cast %183 : vector<8xf32> to vector<8x1xf32>
    %185 = tpu.reciprocal %184 {approx = true} : vector<8x1xf32> -> vector<8x1xf32>
    %186 = vector.broadcast %185 : vector<8x1xf32> to vector<8x8xf32>
    %187 = arith.mulf %182, %186 : vector<8x8xf32>
    %cst_61 = arith.constant dense<0.000000e+00> : vector<8x16xf32>
    %188 = tpu.matmul %187, %172, %cst_61 {dimension_numbers = #tpu.dot_dimension_numbers<[1], [0], [0], [1], [0, 0, 1, 1], [], []>} : vector<8x8xf32>, vector<8x16xf32>, vector<8x16xf32> -> vector<8x16xf32>
    %189 = tpu.concatenate %131, %150, %169, %188 in 1 : vector<8x16xf32>, vector<8x16xf32>, vector<8x16xf32>, vector<8x16xf32> -> vector<8x64xf32>
    %190 = tpu.concatenate %112, %189 in 0 : vector<8x64xf32>, vector<8x64xf32> -> vector<16x64xf32>
    %c0_62 = arith.constant 0 : index
    %c0_63 = arith.constant 0 : index
    %191 = vector.load %arg5[%c0_62, %c0_63] : memref<64x64xf32, #tpu.memory_space<vmem>>, vector<64x64xf32>
    %cst_64 = arith.constant dense<0.000000e+00> : vector<16x64xf32>
    %192 = tpu.matmul %190, %191, %cst_64 {dimension_numbers = #tpu.dot_dimension_numbers<[1], [0], [0], [1], [0, 0, 1, 1], [], []>} : vector<16x64xf32>, vector<64x64xf32>, vector<16x64xf32> -> vector<16x64xf32>
    %193 = arith.addf %0, %192 : vector<16x64xf32>
    %c0_65 = arith.constant 0 : index
    %c0_66 = arith.constant 0 : index
    %194 = vector.load %arg6[%c0_65, %c0_66] : memref<1x64xf32, #tpu.memory_space<vmem>>, vector<1x64xf32>
    %195 = vector.broadcast %194 : vector<1x64xf32> to vector<16x64xf32>
    %196 = arith.addf %193, %195 : vector<16x64xf32>
    %c0_67 = arith.constant 0 : index
    %c0_68 = arith.constant 0 : index
    %197 = vector.load %arg7[%c0_67, %c0_68] : memref<1x64xf32, #tpu.memory_space<vmem>>, vector<1x64xf32>
    %c0_69 = arith.constant 0 : index
    %c0_70 = arith.constant 0 : index
    %198 = vector.load %arg8[%c0_69, %c0_70] : memref<1x64xf32, #tpu.memory_space<vmem>>, vector<1x64xf32>
    %cst_71 = arith.constant dense<0.000000e+00> : vector<16xf32>
    %199 = vector.multi_reduction <add>, %196, %cst_71 [1] : vector<16x64xf32> to vector<16xf32>
    %200 = vector.shape_cast %199 : vector<16xf32> to vector<16x1xf32>
    %cst_72 = arith.constant 6.400000e+01 : f32
    %201 = vector.broadcast %cst_72 : f32 to vector<16x1xf32>
    %202 = arith.divf %200, %201 : vector<16x1xf32>
    %203 = vector.broadcast %202 : vector<16x1xf32> to vector<16x64xf32>
    %204 = arith.subf %196, %203 : vector<16x64xf32>
    %205 = arith.mulf %204, %204 : vector<16x64xf32>
    %cst_73 = arith.constant dense<0.000000e+00> : vector<16xf32>
    %206 = vector.multi_reduction <add>, %205, %cst_73 [1] : vector<16x64xf32> to vector<16xf32>
    %207 = vector.shape_cast %206 : vector<16xf32> to vector<16x1xf32>
    %cst_74 = arith.constant 6.400000e+01 : f32
    %208 = vector.broadcast %cst_74 : f32 to vector<16x1xf32>
    %209 = arith.divf %207, %208 : vector<16x1xf32>
    %210 = vector.broadcast %202 : vector<16x1xf32> to vector<16x64xf32>
    %211 = arith.subf %196, %210 : vector<16x64xf32>
    %cst_75 = arith.constant 9.99999997E-7 : f32
    %212 = vector.broadcast %cst_75 : f32 to vector<16x1xf32>
    %213 = arith.addf %209, %212 : vector<16x1xf32>
    %214 = math.rsqrt %213 : vector<16x1xf32>
    %215 = vector.broadcast %214 : vector<16x1xf32> to vector<16x64xf32>
    %216 = arith.mulf %211, %215 : vector<16x64xf32>
    %217 = vector.broadcast %197 : vector<1x64xf32> to vector<16x64xf32>
    %218 = arith.mulf %216, %217 : vector<16x64xf32>
    %219 = vector.broadcast %198 : vector<1x64xf32> to vector<16x64xf32>
    %220 = arith.addf %218, %219 : vector<16x64xf32>
    %c0_76 = arith.constant 0 : index
    %c0_77 = arith.constant 0 : index
    %221 = vector.load %arg9[%c0_76, %c0_77] : memref<64x128xf32, #tpu.memory_space<vmem>>, vector<64x128xf32>
    %cst_78 = arith.constant dense<0.000000e+00> : vector<16x128xf32>
    %222 = tpu.matmul %220, %221, %cst_78 {dimension_numbers = #tpu.dot_dimension_numbers<[1], [0], [0], [1], [0, 0, 1, 1], [], []>} : vector<16x64xf32>, vector<64x128xf32>, vector<16x128xf32> -> vector<16x128xf32>
    %c0_79 = arith.constant 0 : index
    %c0_80 = arith.constant 0 : index
    %223 = vector.load %arg10[%c0_79, %c0_80] : memref<1x128xf32, #tpu.memory_space<vmem>>, vector<1x128xf32>
    %224 = vector.broadcast %223 : vector<1x128xf32> to vector<16x128xf32>
    %225 = arith.addf %222, %224 : vector<16x128xf32>
    %cst_81 = arith.constant 5.000000e-01 : f32
    %226 = vector.broadcast %cst_81 : f32 to vector<16x128xf32>
    %227 = arith.mulf %226, %225 : vector<16x128xf32>
    %cst_82 = arith.constant 4.471500e-02 : f32
    %228 = vector.broadcast %cst_82 : f32 to vector<16x128xf32>
    %229 = arith.mulf %228, %225 : vector<16x128xf32>
    %230 = arith.mulf %229, %225 : vector<16x128xf32>
    %231 = arith.mulf %230, %225 : vector<16x128xf32>
    %232 = arith.addf %225, %231 : vector<16x128xf32>
    %cst_83 = arith.constant 0.797884583 : f32
    %233 = vector.broadcast %cst_83 : f32 to vector<16x128xf32>
    %234 = arith.mulf %233, %232 : vector<16x128xf32>
    %235 = math.tanh %234 : vector<16x128xf32>
    %cst_84 = arith.constant 1.000000e+00 : f32
    %236 = vector.broadcast %cst_84 : f32 to vector<16x128xf32>
    %237 = arith.addf %236, %235 : vector<16x128xf32>
    %238 = arith.mulf %227, %237 : vector<16x128xf32>
    %c0_85 = arith.constant 0 : index
    %c0_86 = arith.constant 0 : index
    %239 = vector.load %arg11[%c0_85, %c0_86] : memref<128x64xf32, #tpu.memory_space<vmem>>, vector<128x64xf32>
    %cst_87 = arith.constant dense<0.000000e+00> : vector<16x64xf32>
    %240 = tpu.matmul %238, %239, %cst_87 {dimension_numbers = #tpu.dot_dimension_numbers<[1], [0], [0], [1], [0, 0, 1, 1], [], []>} : vector<16x128xf32>, vector<128x64xf32>, vector<16x64xf32> -> vector<16x64xf32>
    %241 = arith.addf %196, %240 : vector<16x64xf32>
    %c0_88 = arith.constant 0 : index
    %c0_89 = arith.constant 0 : index
    %242 = vector.load %arg12[%c0_88, %c0_89] : memref<1x64xf32, #tpu.memory_space<vmem>>, vector<1x64xf32>
    %243 = vector.broadcast %242 : vector<1x64xf32> to vector<16x64xf32>
    %244 = arith.addf %241, %243 : vector<16x64xf32>
    %c0_90 = arith.constant 0 : index
    %c0_91 = arith.constant 0 : index
    %245 = vector.load %arg13[%c0_90, %c0_91] : memref<16x64xf32, #tpu.memory_space<vmem>>, vector<16x64xf32>
    tpu.vector_store %arg13[%c0_90, %c0_91], %244 {strides = array<i32>} : memref<16x64xf32, #tpu.memory_space<vmem>>, vector<16x64xf32>,
    return
  }
}

</mosaic_0001>

<llo_original>
// kernel: _lambda_.7
$region0: #{_lambda_.7}
  #allocation0 [shape = 'u32[]', space=smem, size = 0x4, offset = 0x4, fixed_abs, tag = 'smem constant byte address 0x4 - core index']
  #allocation1 [shape = 'u32[72,128]{1,0:T(1,128)}', space=vmem, size = 0x9000, scoped, tag = 'internal scratch']
  %s0 = inlined_call_operand.vmem [shape: f32[16,64], index: 0, kind: input, shape index: {}]
  %s1 = inlined_call_operand.vmem [shape: f32[1,64], index: 1, kind: input, shape index: {}]
  %s2 = inlined_call_operand.vmem [shape: f32[1,64], index: 2, kind: input, shape index: {}]
  %s3 = inlined_call_operand.vmem [shape: f32[64,128], index: 3, kind: input, shape index: {}]
  %s4 = inlined_call_operand.vmem [shape: f32[1,128], index: 4, kind: input, shape index: {}]
  %s5 = inlined_call_operand.hbm [shape: f32[2,128], index: 5, kind: output, shape index: {}]
  %s6 = sld [smem:[#allocation0]]
  $region30: #{_lambda_.7} parent=0
    _
  %s8 = ssub.s32 1, %s6
  %s9 = scalar_select 0, %s8, %s6
  $region1: #{_lambda_.7} parent=0
    #allocation2 [shape = 'u8[1024]{0}', space=vmem, size = 0x400, scoped, tag = 'output window, operand 0, single buffered']
    #allocation3 [shape = 's32[1]{0}', space=sflag, size = 0x4, scoped, tag = 'scoped memory for _lambda_.7']
    %10 = vsyncpa [#allocation3], 0
    // Predicated region
    $region2: #{_lambda_.7} parent=1 // pred_check
      _
    $region3: #{_lambda_.7} parent=1 // pred_check_branch
      %12 = sbr.rel (0) target = $region5
    $region4: #{_lambda_.7} parent=1 // pred_region
      _
    $region5: #{_lambda_.7} parent=1 // pred_fallthru
      _
    // Predicated region
    $region6: #{_lambda_.7} parent=1 // pred_check
      _
    $region7: #{_lambda_.7} parent=1 // pred_check_branch
      %14 = sbr.rel (0) target = $region9
    $region8: #{_lambda_.7} parent=1 // pred_region
      _
    $region9: #{_lambda_.7} parent=1 // pred_fallthru
      _
    // Predicated region
    $region10: #{_lambda_.7} parent=1 // pred_check
      _
    $region11: #{_lambda_.7} parent=1 // pred_check_branch
      %16 = sbr.rel (0) target = $region13
    $region12: #{_lambda_.7} parent=1 // pred_region
      _
    $region13: #{_lambda_.7} parent=1 // pred_fallthru
      _
    // Predicated region
    $region14: #{_lambda_.7} parent=1 // pred_check
      _
    $region15: #{_lambda_.7} parent=1 // pred_check_branch
      %18 = sbr.rel (0) target = $region17
    $region16: #{_lambda_.7} parent=1 // pred_region
      _
    $region17: #{_lambda_.7} parent=1 // pred_fallthru
      _
    // Predicated region
    $region18: #{_lambda_.7} parent=1 // pred_check
      _
    $region19: #{_lambda_.7} parent=1 // pred_check_branch
      %20 = sbr.rel (0) target = $region21
    $region20: #{_lambda_.7} parent=1 // pred_region
      _
    $region21: #{_lambda_.7} parent=1 // pred_fallthru
      _
    %v21 = vld [vmem:[%s0] sm:$0xff]
    %v22 = vld [vmem:[%s0 + $0x8] sm:$0xff]
    %v24 = vrot.slane %v22, 7
    %vm26 = vcmask 1040384
    %v27 = vsel %vm26, %v21, %v24
    %v28 = vld [vmem:[%s1] sm:$0x1]
    %v29 = vld [vmem:[%s2] sm:$0x1]
    %vm30 = vcmask 517120
    %v31 = vsel %vm30, %v27, 0.0
    %32 = vadd.xlane.f32.xlu0 %v31
    %v33 = vpop.xlane.xlu0 %32
    %v34 = vrcp.pop 64.0
    %v35 = vmul.f32 64.0, %v34
    %v36 = vsub.f32 1.0, %v35
    %v37 = vmul.f32 %v34, %v36
    %v38 = vadd.f32 %v34, %v37
    %vm39 = vweird.f32 %v34
    %v40 = vsel %vm39, %v34, %v38
    %v41 = vmul.f32 %v33, %v40
    %v42 = vsub.f32 %v27, %v41
    %v43 = vmul.f32 %v42, %v42
    %v44 = vsel %vm30, %v43, 0.0
    %45 = vadd.xlane.f32.xlu0 %v44
    %v46 = vpop.xlane.xlu0 %45
    %v47 = vmul.f32 %v46, %v40
    %v48 = vadd.f32 %v47, 1e-06
    %v49 = vrsqrt.pop %v48
    %v50 = vmul.f32 %v49, %v48
    %v51 = vmul.f32 %v50, %v49
    %v52 = vmul.f32 0.5, %v51
    %v53 = vsub.f32 1.5, %v52
    %v54 = vmul.f32 %v49, %v53
    %vm55 = vweird.f32 %v48
    %vm56 = vweird.f32 %v49
    %vm57 = vmor %vm55, %vm56
    %v58 = vsel %vm57, %v49, %v54
    %v59 = vmul.f32 %v42, %v58
    %v61 = vperm.slane %v28, 0
    %v63 = vmul.f32 %v59, %v61
    %v65 = vperm.slane %v29, 0
    %v67 = vadd.f32 %v63, %v65
    %v68 = vld [vmem:[%s3] sm:$0xff]
    %v69 = vld [vmem:[%s3 + $0x8] sm:$0xff]
    %v70 = vld [vmem:[%s3 + $0x10] sm:$0xff]
    %v71 = vld [vmem:[%s3 + $0x18] sm:$0xff]
    %v72 = vld [vmem:[%s3 + $0x20] sm:$0xff]
    %v73 = vld [vmem:[%s3 + $0x28] sm:$0xff]
    %v74 = vld [vmem:[%s3 + $0x30] sm:$0xff]
    %v75 = vld [vmem:[%s3 + $0x38] sm:$0xff]
    %v76 = vld [vmem:[%s4] sm:$0x1]
    %v78 = vperm.slane %v76, 0
    %vm80 = vcmask 523264
    %v82 = vsel %vm80, %v67, 0
    %84 = vmatpush.msra.mxu0 0.0
    %85 = vmatpush.msra.mxu0 0.0
    %86 = vmatpush.msra.mxu0 0.0
    %87 = vmatpush.msra.mxu0 0.0
    %88 = vmatpush.msra.mxu0 0.0
    %89 = vmatpush.msra.mxu0 0.0
    %90 = vmatpush.msra.mxu0 0.0
    %91 = vmatpush.msra.mxu0 0.0
    %92 = vmatpush.msra.mxu0 %v75
    %93 = vmatpush.msra.mxu0 %v74
    %94 = vmatpush.msra.mxu0 %v73
    %95 = vmatpush.msra.mxu0 %v72
    %96 = vmatpush.msra.mxu0 %v71
    %97 = vmatpush.msra.mxu0 %v70
    %98 = vmatpush.msra.mxu0 %v69
    %99 = vmatpush.msra.mxu0 %v68
    %100 = vmatmul.f32.gmra.mxu0 %v82
    %v101 = vpop.f32.mrf.mxu0
    %v102 = vadd.f32 %v78, %v101
    %103 = vdwg.mxu0
    %v104 = vlaneseq
    %v105 = vand.u32 %v104, 127
    %vm106 = vcmp.lt.s32.totalorder %v105, 16
    %v107 = vsel %vm106, %v102, -1e+30
    %vm108 = vcmask 1041408
    %v109 = vsel %vm108, %v107, -inf
    %110 = vmax.xlane.f32.xlu0 %v109
    %v111 = vpop.xlane.xlu0 %110
    %v112 = vsub.f32 %v107, %v111
    %v113 = vmul.f32 %v112, 1.442695
    %v114 = vpow.pop %v113
    %v115 = vsel %vm108, %v114, 0.0
    %116 = vadd.xlane.f32.xlu0 %v115
    %v117 = vpop.xlane.xlu0 %116
    %v118 = vrcp.pop %v117
    %v119 = vmul.f32 %v117, %v118
    %v120 = vsub.f32 1.0, %v119
    %v121 = vmul.f32 %v118, %v120
    %v122 = vadd.f32 %v118, %v121
    %vm123 = vweird.f32 %v117
    %vm124 = vweird.f32 %v118
    %vm125 = vmor %vm123, %vm124
    %v126 = vsel %vm125, %v118, %v122
    %v127 = vand.u32 2147483647, %v117
    %vm128 = vcmp.eq.f32.partialorder %v127, 8.507059e+37
    %v129 = vand.u32 %v117, 2147483648
    %v130 = vor.u32 1.1754944e-38, %v129
    %v131 = vsel %vm128, %v130, %v126
    %v132 = vmul.f32 %v114, %v131
    %133 = vst [vmem:[#allocation2] sm:$0x3] %v132
    // Predicated region
    $region22: #{_lambda_.7} parent=1 // pred_check
      _
    $region23: #{_lambda_.7} parent=1 // pred_check_branch
      %135 = sbr.rel (0) target = $region25
    $region24: #{_lambda_.7} parent=1 // pred_region
      %137 = vsyncadd [#allocation3], 0
      %s139 = sshll.u32 [#allocation2], 4
      %s140 = int_to_ptr.vmem [resolvable:$true] %s139
      %s141 = sshll.u32 %s5, 4
      %s142 = int_to_ptr.hbm [resolvable:$true] %s141
      %144 = dma.vmem_to_hbm [thread:$0]  %s140, 32, %s142, [#allocation3]
    $region25: #{_lambda_.7} parent=1 // pred_fallthru
      _
    // Predicated region
    $region26: #{_lambda_.7} parent=1 // pred_check
      _
    $region27: #{_lambda_.7} parent=1 // pred_check_branch
      %146 = sbr.rel (0) target = $region29
    $region28: #{_lambda_.7} parent=1 // pred_region
      %148 = dma.done [#allocation3], 32
    $region29: #{_lambda_.7} parent=1 // pred_fallthru
      _
    %149 = vsyncpa [#allocation3], 1

// kernel: _lambda_.4
$region0: #{_lambda_.4}
  #allocation0 [shape = 'u32[]', space=smem, size = 0x4, offset = 0x4, fixed_abs, tag = 'smem constant byte address 0x4 - core index']
  #allocation1 [shape = 'u32[72,128]{1,0:T(1,128)}', space=vmem, size = 0x9000, scoped, tag = 'internal scratch']
  %s0 = inlined_call_operand.vmem [shape: f32[8,768], index: 0, kind: input, shape index: {}]
  %s1 = inlined_call_operand.vmem [shape: f32[768,64], index: 1, kind: input, shape index: {}]
  %s2 = inlined_call_operand.vmem [shape: f32[1,64], index: 2, kind: input, shape index: {}]
  %s3 = inlined_call_operand.vmem [shape: f32[1,64], index: 3, kind: input, shape index: {}]
  %s4 = inlined_call_operand.vmem [shape: f32[8,64], index: 4, kind: input, shape index: {}]
  %s5 = inlined_call_operand.vmem [shape: f32[16,64], index: 5, kind: output, shape index: {}]
  %s6 = sld [smem:[#allocation0]]
  $region30: #{_lambda_.4} parent=0
    _
  %s8 = ssub.s32 1, %s6
  %s9 = scalar_select 0, %s8, %s6
  // Predicated region
  $region2: #{_lambda_.4} parent=0 // pred_check
    _
  $region3: #{_lambda_.4} parent=0 // pred_check_branch
    %11 = sbr.rel (0) target = $region5
  $region4: #{_lambda_.4} parent=0 // pred_region
    _
  $region5: #{_lambda_.4} parent=0 // pred_fallthru
    _
  // Predicated region
  $region6: #{_lambda_.4} parent=0 // pred_check
    _
  $region7: #{_lambda_.4} parent=0 // pred_check_branch
    %13 = sbr.rel (0) target = $region9
  $region8: #{_lambda_.4} parent=0 // pred_region
    _
  $region9: #{_lambda_.4} parent=0 // pred_fallthru
    _
  // Predicated region
  $region10: #{_lambda_.4} parent=0 // pred_check
    _
  $region11: #{_lambda_.4} parent=0 // pred_check_branch
    %15 = sbr.rel (0) target = $region13
  $region12: #{_lambda_.4} parent=0 // pred_region
    _
  $region13: #{_lambda_.4} parent=0 // pred_fallthru
    _
  // Predicated region
  $region14: #{_lambda_.4} parent=0 // pred_check
    _
  $region15: #{_lambda_.4} parent=0 // pred_check_branch
    %17 = sbr.rel (0) target = $region17
  $region16: #{_lambda_.4} parent=0 // pred_region
    _
  $region17: #{_lambda_.4} parent=0 // pred_fallthru
    _
  // Predicated region
  $region18: #{_lambda_.4} parent=0 // pred_check
    _
  $region19: #{_lambda_.4} parent=0 // pred_check_branch
    %19 = sbr.rel (0) target = $region21
  $region20: #{_lambda_.4} parent=0 // pred_region
    _
  $region21: #{_lambda_.4} parent=0 // pred_fallthru
    _
  %v20 = vld [vmem:[%s0] sm:$0xff]
  %v21 = vld [vmem:[%s0 + $0x8] sm:$0xff]
  %v22 = vld [vmem:[%s0 + $0x10] sm:$0xff]
  %v23 = vld [vmem:[%s0 + $0x18] sm:$0xff]
  %v24 = vld [vmem:[%s0 + $0x20] sm:$0xff]
  %v25 = vld [vmem:[%s0 + $0x28] sm:$0xff]
  %v26 = vld [vmem:[%s1] sm:$0xff]
  %v27 = vld [vmem:[%s1 + $0x8] sm:$0xff]
  %v28 = vld [vmem:[%s1 + $0x10] sm:$0xff]
  %v29 = vld [vmem:[%s1 + $0x18] sm:$0xff]
  %v30 = vld [vmem:[%s1 + $0x20] sm:$0xff]
  %v31 = vld [vmem:[%s1 + $0x28] sm:$0xff]
  %v32 = vld [vmem:[%s1 + $0x30] sm:$0xff]
  %v33 = vld [vmem:[%s1 + $0x38] sm:$0xff]
  %v34 = vld [vmem:[%s1 + $0x40] sm:$0xff]
  %v35 = vld [vmem:[%s1 + $0x48] sm:$0xff]
  %v36 = vld [vmem:[%s1 + $0x50] sm:$0xff]
  %v37 = vld [vmem:[%s1 + $0x58] sm:$0xff]
  %v38 = vld [vmem:[%s1 + $0x60] sm:$0xff]
  %v39 = vld [vmem:[%s1 + $0x68] sm:$0xff]
  %v40 = vld [vmem:[%s1 + $0x70] sm:$0xff]
  %v41 = vld [vmem:[%s1 + $0x78] sm:$0xff]
  %v42 = vld [vmem:[%s1 + $0x80] sm:$0xff]
  %v43 = vld [vmem:[%s1 + $0x88] sm:$0xff]
  %v44 = vld [vmem:[%s1 + $0x90] sm:$0xff]
  %v45 = vld [vmem:[%s1 + $0x98] sm:$0xff]
  %v46 = vld [vmem:[%s1 + $0xa0] sm:$0xff]
  %v47 = vld [vmem:[%s1 + $0xa8] sm:$0xff]
  %v48 = vld [vmem:[%s1 + $0xb0] sm:$0xff]
  %v49 = vld [vmem:[%s1 + $0xb8] sm:$0xff]
  %v50 = vld [vmem:[%s1 + $0xc0] sm:$0xff]
  %v51 = vld [vmem:[%s1 + $0xc8] sm:$0xff]
  %v52 = vld [vmem:[%s1 + $0xd0] sm:$0xff]
  %v53 = vld [vmem:[%s1 + $0xd8] sm:$0xff]
  %v54 = vld [vmem:[%s1 + $0xe0] sm:$0xff]
  %v55 = vld [vmem:[%s1 + $0xe8] sm:$0xff]
  %v56 = vld [vmem:[%s1 + $0xf0] sm:$0xff]
  %v57 = vld [vmem:[%s1 + $0xf8] sm:$0xff]
  %v58 = vld [vmem:[%s1 + $0x100] sm:$0xff]
  %v59 = vld [vmem:[%s1 + $0x108] sm:$0xff]
  %v60 = vld [vmem:[%s1 + $0x110] sm:$0xff]
  %v61 = vld [vmem:[%s1 + $0x118] sm:$0xff]
  %v62 = vld [vmem:[%s1 + $0x120] sm:$0xff]
  %v63 = vld [vmem:[%s1 + $0x128] sm:$0xff]
  %v64 = vld [vmem:[%s1 + $0x130] sm:$0xff]
  %v65 = vld [vmem:[%s1 + $0x138] sm:$0xff]
  %v66 = vld [vmem:[%s1 + $0x140] sm:$0xff]
  %v67 = vld [vmem:[%s1 + $0x148] sm:$0xff]
  %v68 = vld [vmem:[%s1 + $0x150] sm:$0xff]
  %v69 = vld [vmem:[%s1 + $0x158] sm:$0xff]
  %v70 = vld [vmem:[%s1 + $0x160] sm:$0xff]
  %v71 = vld [vmem:[%s1 + $0x168] sm:$0xff]
  %v72 = vld [vmem:[%s1 + $0x170] sm:$0xff]
  %v73 = vld [vmem:[%s1 + $0x178] sm:$0xff]
  %v74 = vld [vmem:[%s1 + $0x180] sm:$0xff]
  %v75 = vld [vmem:[%s1 + $0x188] sm:$0xff]
  %v76 = vld [vmem:[%s1 + $0x190] sm:$0xff]
  %v77 = vld [vmem:[%s1 + $0x198] sm:$0xff]
  %v78 = vld [vmem:[%s1 + $0x1a0] sm:$0xff]
  %v79 = vld [vmem:[%s1 + $0x1a8] sm:$0xff]
  %v80 = vld [vmem:[%s1 + $0x1b0] sm:$0xff]
  %v81 = vld [vmem:[%s1 + $0x1b8] sm:$0xff]
  %v82 = vld [vmem:[%s1 + $0x1c0] sm:$0xff]
  %v83 = vld [vmem:[%s1 + $0x1c8] sm:$0xff]
  %v84 = vld [vmem:[%s1 + $0x1d0] sm:$0xff]
  %v85 = vld [vmem:[%s1 + $0x1d8] sm:$0xff]
  %v86 = vld [vmem:[%s1 + $0x1e0] sm:$0xff]
  %v87 = vld [vmem:[%s1 + $0x1e8] sm:$0xff]
  %v88 = vld [vmem:[%s1 + $0x1f0] sm:$0xff]
  %v89 = vld [vmem:[%s1 + $0x1f8] sm:$0xff]
  %v90 = vld [vmem:[%s1 + $0x200] sm:$0xff]
  %v91 = vld [vmem:[%s1 + $0x208] sm:$0xff]
  %v92 = vld [vmem:[%s1 + $0x210] sm:$0xff]
  %v93 = vld [vmem:[%s1 + $0x218] sm:$0xff]
  %v94 = vld [vmem:[%s1 + $0x220] sm:$0xff]
  %v95 = vld [vmem:[%s1 + $0x228] sm:$0xff]
  %v96 = vld [vmem:[%s1 + $0x230] sm:$0xff]
  %v97 = vld [vmem:[%s1 + $0x238] sm:$0xff]
  %v98 = vld [vmem:[%s1 + $0x240] sm:$0xff]
  %v99 = vld [vmem:[%s1 + $0x248] sm:$0xff]
  %v100 = vld [vmem:[%s1 + $0x250] sm:$0xff]
  %v101 = vld [vmem:[%s1 + $0x258] sm:$0xff]
  %v102 = vld [vmem:[%s1 + $0x260] sm:$0xff]
  %v103 = vld [vmem:[%s1 + $0x268] sm:$0xff]
  %v104 = vld [vmem:[%s1 + $0x270] sm:$0xff]
  %v105 = vld [vmem:[%s1 + $0x278] sm:$0xff]
  %v106 = vld [vmem:[%s1 + $0x280] sm:$0xff]
  %v107 = vld [vmem:[%s1 + $0x288] sm:$0xff]
  %v108 = vld [vmem:[%s1 + $0x290] sm:$0xff]
  %v109 = vld [vmem:[%s1 + $0x298] sm:$0xff]
  %v110 = vld [vmem:[%s1 + $0x2a0] sm:$0xff]
  %v111 = vld [vmem:[%s1 + $0x2a8] sm:$0xff]
  %v112 = vld [vmem:[%s1 + $0x2b0] sm:$0xff]
  %v113 = vld [vmem:[%s1 + $0x2b8] sm:$0xff]
  %v114 = vld [vmem:[%s1 + $0x2c0] sm:$0xff]
  %v115 = vld [vmem:[%s1 + $0x2c8] sm:$0xff]
  %v116 = vld [vmem:[%s1 + $0x2d0] sm:$0xff]
  %v117 = vld [vmem:[%s1 + $0x2d8] sm:$0xff]
  %v118 = vld [vmem:[%s1 + $0x2e0] sm:$0xff]
  %v119 = vld [vmem:[%s1 + $0x2e8] sm:$0xff]
  %v120 = vld [vmem:[%s1 + $0x2f0] sm:$0xff]
  %v121 = vld [vmem:[%s1 + $0x2f8] sm:$0xff]
  %v122 = vld [vmem:[%s2] sm:$0x1]
  %v124 = vperm.slane %v122, 0
  %126 = vmatpush.msra.mxu0 %v41
  %127 = vmatpush.msra.mxu0 %v40
  %128 = vmatpush.msra.mxu0 %v39
  %129 = vmatpush.msra.mxu0 %v38
  %130 = vmatpush.msra.mxu0 %v37
  %131 = vmatpush.msra.mxu0 %v36
  %132 = vmatpush.msra.mxu0 %v35
  %133 = vmatpush.msra.mxu0 %v34
  %134 = vmatpush.msra.mxu0 %v33
  %135 = vmatpush.msra.mxu0 %v32
  %136 = vmatpush.msra.mxu0 %v31
  %137 = vmatpush.msra.mxu0 %v30
  %138 = vmatpush.msra.mxu0 %v29
  %139 = vmatpush.msra.mxu0 %v28
  %140 = vmatpush.msra.mxu0 %v27
  %141 = vmatpush.msra.mxu0 %v26
  %142 = vmatmul.f32.gmra.mxu0 %v20
  %v143 = vpop.f32.mrf.mxu0
  %v144 = vadd.f32 %v124, %v143
  %145 = vdwg.mxu0
  %146 = vmatpush.msra.mxu0 %v57
  %147 = vmatpush.msra.mxu0 %v56
  %148 = vmatpush.msra.mxu0 %v55
  %149 = vmatpush.msra.mxu0 %v54
  %150 = vmatpush.msra.mxu0 %v53
  %151 = vmatpush.msra.mxu0 %v52
  %152 = vmatpush.msra.mxu0 %v51
  %153 = vmatpush.msra.mxu0 %v50
  %154 = vmatpush.msra.mxu0 %v49
  %155 = vmatpush.msra.mxu0 %v48
  %156 = vmatpush.msra.mxu0 %v47
  %157 = vmatpush.msra.mxu0 %v46
  %158 = vmatpush.msra.mxu0 %v45
  %159 = vmatpush.msra.mxu0 %v44
  %160 = vmatpush.msra.mxu0 %v43
  %161 = vmatpush.msra.mxu0 %v42
  %162 = vmatmul.f32.gmra.mxu0 %v21
  %v163 = vpop.f32.mrf.mxu0
  %v164 = vadd.f32 %v144, %v163
  %165 = vdwg.mxu0
  %166 = vmatpush.msra.mxu0 %v73
  %167 = vmatpush.msra.mxu0 %v72
  %168 = vmatpush.msra.mxu0 %v71
  %169 = vmatpush.msra.mxu0 %v70
  %170 = vmatpush.msra.mxu0 %v69
  %171 = vmatpush.msra.mxu0 %v68
  %172 = vmatpush.msra.mxu0 %v67
  %173 = vmatpush.msra.mxu0 %v66
  %174 = vmatpush.msra.mxu0 %v65
  %175 = vmatpush.msra.mxu0 %v64
  %176 = vmatpush.msra.mxu0 %v63
  %177 = vmatpush.msra.mxu0 %v62
  %178 = vmatpush.msra.mxu0 %v61
  %179 = vmatpush.msra.mxu0 %v60
  %180 = vmatpush.msra.mxu0 %v59
  %181 = vmatpush.msra.mxu0 %v58
  %182 = vmatmul.f32.gmra.mxu0 %v22
  %v183 = vpop.f32.mrf.mxu0
  %v184 = vadd.f32 %v164, %v183
  %185 = vdwg.mxu0
  %186 = vmatpush.msra.mxu0 %v89
  %187 = vmatpush.msra.mxu0 %v88
  %188 = vmatpush.msra.mxu0 %v87
  %189 = vmatpush.msra.mxu0 %v86
  %190 = vmatpush.msra.mxu0 %v85
  %191 = vmatpush.msra.mxu0 %v84
  %192 = vmatpush.msra.mxu0 %v83
  %193 = vmatpush.msra.mxu0 %v82
  %194 = vmatpush.msra.mxu0 %v81
  %195 = vmatpush.msra.mxu0 %v80
  %196 = vmatpush.msra.mxu0 %v79
  %197 = vmatpush.msra.mxu0 %v78
  %198 = vmatpush.msra.mxu0 %v77
  %199 = vmatpush.msra.mxu0 %v76
  %200 = vmatpush.msra.mxu0 %v75
  %201 = vmatpush.msra.mxu0 %v74
  %202 = vmatmul.f32.gmra.mxu0 %v23
  %v203 = vpop.f32.mrf.mxu0
  %v204 = vadd.f32 %v184, %v203
  %205 = vdwg.mxu0
  %206 = vmatpush.msra.mxu0 %v105
  %207 = vmatpush.msra.mxu0 %v104
  %208 = vmatpush.msra.mxu0 %v103
  %209 = vmatpush.msra.mxu0 %v102
  %210 = vmatpush.msra.mxu0 %v101
  %211 = vmatpush.msra.mxu0 %v100
  %212 = vmatpush.msra.mxu0 %v99
  %213 = vmatpush.msra.mxu0 %v98
  %214 = vmatpush.msra.mxu0 %v97
  %215 = vmatpush.msra.mxu0 %v96
  %216 = vmatpush.msra.mxu0 %v95
  %217 = vmatpush.msra.mxu0 %v94
  %218 = vmatpush.msra.mxu0 %v93
  %219 = vmatpush.msra.mxu0 %v92
  %220 = vmatpush.msra.mxu0 %v91
  %221 = vmatpush.msra.mxu0 %v90
  %222 = vmatmul.f32.gmra.mxu0 %v24
  %v223 = vpop.f32.mrf.mxu0
  %v224 = vadd.f32 %v204, %v223
  %225 = vdwg.mxu0
  %226 = vmatpush.msra.mxu0 %v121
  %227 = vmatpush.msra.mxu0 %v120
  %228 = vmatpush.msra.mxu0 %v119
  %229 = vmatpush.msra.mxu0 %v118
  %230 = vmatpush.msra.mxu0 %v117
  %231 = vmatpush.msra.mxu0 %v116
  %232 = vmatpush.msra.mxu0 %v115
  %233 = vmatpush.msra.mxu0 %v114
  %234 = vmatpush.msra.mxu0 %v113
  %235 = vmatpush.msra.mxu0 %v112
  %236 = vmatpush.msra.mxu0 %v111
  %237 = vmatpush.msra.mxu0 %v110
  %238 = vmatpush.msra.mxu0 %v109
  %239 = vmatpush.msra.mxu0 %v108
  %240 = vmatpush.msra.mxu0 %v107
  %241 = vmatpush.msra.mxu0 %v106
  %242 = vmatmul.f32.gmra.mxu0 %v25
  %v243 = vpop.f32.mrf.mxu0
  %v244 = vadd.f32 %v224, %v243
  %245 = vdwg.mxu0
  %v246 = vld [vmem:[%s4] sm:$0xff]
  %v247 = vld [vmem:[%s3] sm:$0x1]
  %v249 = vrot.slane %v244, 7
  %vm251 = vcmask 1040384
  %v252 = vsel %vm251, %v247, %v249
  %vm253 = vcmask 1044480
  %v254 = vsel %vm253, %v252, 0.0
  %v255 = vadd.f32 %v254, %v246
  %v256 = vrot.slane %v244, 3
  %v258 = vsel %vm251, %v247, %v256
  %v259 = vsel %vm253, %v258, 0.0
  %v260 = vadd.f32 %v259, %v246
  %vm261 = vcmask 523264
  %262 = vst.msk [vmem:[%s5] sm:$0xff] %vm261, %v255
  %263 = vst.msk [vmem:[%s5 + $0x8] sm:$0xff] %vm261, %v260
  // Predicated region
  $region22: #{_lambda_.4} parent=0 // pred_check
    _
  $region23: #{_lambda_.4} parent=0 // pred_check_branch
    %265 = sbr.rel (0) target = $region25
  $region24: #{_lambda_.4} parent=0 // pred_region
    _
  $region25: #{_lambda_.4} parent=0 // pred_fallthru
    _
  // Predicated region
  $region26: #{_lambda_.4} parent=0 // pred_check
    _
  $region27: #{_lambda_.4} parent=0 // pred_check_branch
    %267 = sbr.rel (0) target = $region29
  $region28: #{_lambda_.4} parent=0 // pred_region
    _
  $region29: #{_lambda_.4} parent=0 // pred_fallthru
    _

// kernel: _lambda_.5
$region0: #{_lambda_.5}
  #allocation0 [shape = 'u32[]', space=smem, size = 0x4, offset = 0x4, fixed_abs, tag = 'smem constant byte address 0x4 - core index']
  #allocation1 [shape = 'u32[72,128]{1,0:T(1,128)}', space=vmem, size = 0x9000, scoped, tag = 'internal scratch']
  %s0 = inlined_call_operand.vmem [shape: f32[16,64], index: 0, kind: input, shape index: {}]
  %s1 = inlined_call_operand.vmem [shape: f32[1,64], index: 1, kind: input, shape index: {}]
  %s2 = inlined_call_operand.vmem [shape: f32[1,64], index: 2, kind: input, shape index: {}]
  %s3 = inlined_call_operand.vmem [shape: f32[64,192], index: 3, kind: input, shape index: {}]
  %s4 = inlined_call_operand.vmem [shape: f32[1,192], index: 4, kind: input, shape index: {}]
  %s5 = inlined_call_operand.vmem [shape: f32[64,64], index: 5, kind: input, shape index: {}]
  %s6 = inlined_call_operand.vmem [shape: f32[1,64], index: 6, kind: input, shape index: {}]
  %s7 = inlined_call_operand.vmem [shape: f32[1,64], index: 7, kind: input, shape index: {}]
  %s8 = inlined_call_operand.vmem [shape: f32[1,64], index: 8, kind: input, shape index: {}]
  %s9 = inlined_call_operand.vmem [shape: f32[64,128], index: 9, kind: input, shape index: {}]
  %s10 = inlined_call_operand.vmem [shape: f32[1,128], index: 10, kind: input, shape index: {}]
  %s11 = inlined_call_operand.vmem [shape: f32[128,64], index: 11, kind: input, shape index: {}]
  %s12 = inlined_call_operand.vmem [shape: f32[1,64], index: 12, kind: input, shape index: {}]
  %s13 = inlined_call_operand.vmem [shape: f32[16,64], index: 13, kind: output, shape index: {}]
  %s14 = sld [smem:[#allocation0]]
  $region62: #{_lambda_.5} parent=0
    _
  %s16 = ssub.s32 1, %s14
  %s17 = scalar_select 0, %s16, %s14
  // Predicated region
  $region2: #{_lambda_.5} parent=0 // pred_check
    _
  $region3: #{_lambda_.5} parent=0 // pred_check_branch
    %19 = sbr.rel (0) target = $region5
  $region4: #{_lambda_.5} parent=0 // pred_region
    _
  $region5: #{_lambda_.5} parent=0 // pred_fallthru
    _
  // Predicated region
  $region6: #{_lambda_.5} parent=0 // pred_check
    _
  $region7: #{_lambda_.5} parent=0 // pred_check_branch
    %21 = sbr.rel (0) target = $region9
  $region8: #{_lambda_.5} parent=0 // pred_region
    _
  $region9: #{_lambda_.5} parent=0 // pred_fallthru
    _
  // Predicated region
  $region10: #{_lambda_.5} parent=0 // pred_check
    _
  $region11: #{_lambda_.5} parent=0 // pred_check_branch
    %23 = sbr.rel (0) target = $region13
  $region12: #{_lambda_.5} parent=0 // pred_region
    _
  $region13: #{_lambda_.5} parent=0 // pred_fallthru
    _
  // Predicated region
  $region14: #{_lambda_.5} parent=0 // pred_check
    _
  $region15: #{_lambda_.5} parent=0 // pred_check_branch
    %25 = sbr.rel (0) target = $region17
  $region16: #{_lambda_.5} parent=0 // pred_region
    _
  $region17: #{_lambda_.5} parent=0 // pred_fallthru
    _
  // Predicated region
  $region18: #{_lambda_.5} parent=0 // pred_check
    _
  $region19: #{_lambda_.5} parent=0 // pred_check_branch
    %27 = sbr.rel (0) target = $region21
  $region20: #{_lambda_.5} parent=0 // pred_region
    _
  $region21: #{_lambda_.5} parent=0 // pred_fallthru
    _
  // Predicated region
  $region22: #{_lambda_.5} parent=0 // pred_check
    _
  $region23: #{_lambda_.5} parent=0 // pred_check_branch
    %29 = sbr.rel (0) target = $region25
  $region24: #{_lambda_.5} parent=0 // pred_region
    _
  $region25: #{_lambda_.5} parent=0 // pred_fallthru
    _
  // Predicated region
  $region26: #{_lambda_.5} parent=0 // pred_check
    _
  $region27: #{_lambda_.5} parent=0 // pred_check_branch
    %31 = sbr.rel (0) target = $region29
  $region28: #{_lambda_.5} parent=0 // pred_region
    _
  $region29: #{_lambda_.5} parent=0 // pred_fallthru
    _
  // Predicated region
  $region30: #{_lambda_.5} parent=0 // pred_check
    _
  $region31: #{_lambda_.5} parent=0 // pred_check_branch
    %33 = sbr.rel (0) target = $region33
  $region32: #{_lambda_.5} parent=0 // pred_region
    _
  $region33: #{_lambda_.5} parent=0 // pred_fallthru
    _
  // Predicated region
  $region34: #{_lambda_.5} parent=0 // pred_check
    _
  $region35: #{_lambda_.5} parent=0 // pred_check_branch
    %35 = sbr.rel (0) target = $region37
  $region36: #{_lambda_.5} parent=0 // pred_region
    _
  $region37: #{_lambda_.5} parent=0 // pred_fallthru
    _
  // Predicated region
  $region38: #{_lambda_.5} parent=0 // pred_check
    _
  $region39: #{_lambda_.5} parent=0 // pred_check_branch
    %37 = sbr.rel (0) target = $region41
  $region40: #{_lambda_.5} parent=0 // pred_region
    _
  $region41: #{_lambda_.5} parent=0 // pred_fallthru
    _
  // Predicated region
  $region42: #{_lambda_.5} parent=0 // pred_check
    _
  $region43: #{_lambda_.5} parent=0 // pred_check_branch
    %39 = sbr.rel (0) target = $region45
  $region44: #{_lambda_.5} parent=0 // pred_region
    _
  $region45: #{_lambda_.5} parent=0 // pred_fallthru
    _
  // Predicated region
  $region46: #{_lambda_.5} parent=0 // pred_check
    _
  $region47: #{_lambda_.5} parent=0 // pred_check_branch
    %41 = sbr.rel (0) target = $region49
  $region48: #{_lambda_.5} parent=0 // pred_region
    _
  $region49: #{_lambda_.5} parent=0 // pred_fallthru
    _
  // Predicated region
  $region50: #{_lambda_.5} parent=0 // pred_check
    _
  $region51: #{_lambda_.5} parent=0 // pred_check_branch
    %43 = sbr.rel (0) target = $region53
  $region52: #{_lambda_.5} parent=0 // pred_region
    _
  $region53: #{_lambda_.5} parent=0 // pred_fallthru
    _
  %v44 = vld [vmem:[%s0] sm:$0xff]
  %v45 = vld [vmem:[%s0 + $0x8] sm:$0xff]
  %v46 = vld [vmem:[%s1] sm:$0x1]
  %v47 = vld [vmem:[%s2] sm:$0x1]
  %vm48 = vcmask 523264
  %v49 = vsel %vm48, %v44, 0.0
  %50 = vadd.xlane.f32.xlu0 %v49
  %v51 = vpop.xlane.xlu0 %50
  %v52 = vsel %vm48, %v45, 0.0
  %53 = vadd.xlane.f32.xlu0 %v52
  %v54 = vpop.xlane.xlu0 %53
  %v55 = vrcp.pop 64.0
  %v56 = vmul.f32 64.0, %v55
  %v57 = vsub.f32 1.0, %v56
  %v58 = vmul.f32 %v55, %v57
  %v59 = vadd.f32 %v55, %v58
  %vm60 = vweird.f32 %v55
  %v61 = vsel %vm60, %v55, %v59
  %v62 = vmul.f32 %v51, %v61
  %v63 = vmul.f32 %v54, %v61
  %v64 = vsub.f32 %v44, %v62
  %v65 = vsub.f32 %v45, %v63
  %v66 = vmul.f32 %v64, %v64
  %v67 = vmul.f32 %v65, %v65
  %v68 = vsel %vm48, %v66, 0.0
  %69 = vadd.xlane.f32.xlu0 %v68
  %v70 = vpop.xlane.xlu0 %69
  %v71 = vsel %vm48, %v67, 0.0
  %72 = vadd.xlane.f32.xlu0 %v71
  %v73 = vpop.xlane.xlu0 %72
  %v74 = vmul.f32 %v70, %v61
  %v75 = vmul.f32 %v73, %v61
  %v76 = vadd.f32 %v74, 1e-06
  %v77 = vadd.f32 %v75, 1e-06
  %v78 = vrsqrt.pop %v76
  %v79 = vmul.f32 %v78, %v76
  %v80 = vmul.f32 %v79, %v78
  %v81 = vmul.f32 0.5, %v80
  %v82 = vsub.f32 1.5, %v81
  %v83 = vmul.f32 %v78, %v82
  %vm84 = vweird.f32 %v76
  %vm85 = vweird.f32 %v78
  %vm86 = vmor %vm84, %vm85
  %v87 = vsel %vm86, %v78, %v83
  %v88 = vrsqrt.pop %v77
  %v89 = vmul.f32 %v88, %v77
  %v90 = vmul.f32 %v89, %v88
  %v91 = vmul.f32 0.5, %v90
  %v92 = vsub.f32 1.5, %v91
  %v93 = vmul.f32 %v88, %v92
  %vm94 = vweird.f32 %v77
  %vm95 = vweird.f32 %v88
  %vm96 = vmor %vm94, %vm95
  %v97 = vsel %vm96, %v88, %v93
  %v98 = vmul.f32 %v64, %v87
  %v99 = vmul.f32 %v65, %v97
  %v101 = vperm.slane %v46, 0
  %v103 = vmul.f32 %v98, %v101
  %v104 = vmul.f32 %v99, %v101
  %v106 = vperm.slane %v47, 0
  %v108 = vadd.f32 %v103, %v106
  %v109 = vadd.f32 %v104, %v106
  %v110 = vld [vmem:[%s3] sm:$0xff]
  %v111 = vld [vmem:[%s3 + $0x8] sm:$0xff]
  %v112 = vld [vmem:[%s3 + $0x10] sm:$0xff]
  %v113 = vld [vmem:[%s3 + $0x18] sm:$0xff]
  %v114 = vld [vmem:[%s3 + $0x20] sm:$0xff]
  %v115 = vld [vmem:[%s3 + $0x28] sm:$0xff]
  %v116 = vld [vmem:[%s3 + $0x30] sm:$0xff]
  %v117 = vld [vmem:[%s3 + $0x38] sm:$0xff]
  %v118 = vld [vmem:[%s3 + $0x40] sm:$0xff]
  %v119 = vld [vmem:[%s3 + $0x48] sm:$0xff]
  %v120 = vld [vmem:[%s3 + $0x50] sm:$0xff]
  %v121 = vld [vmem:[%s3 + $0x58] sm:$0xff]
  %v122 = vld [vmem:[%s3 + $0x60] sm:$0xff]
  %v123 = vld [vmem:[%s3 + $0x68] sm:$0xff]
  %v124 = vld [vmem:[%s3 + $0x70] sm:$0xff]
  %v125 = vld [vmem:[%s3 + $0x78] sm:$0xff]
  %v126 = vld [vmem:[%s4] sm:$0x3]
  %v128 = vperm.slane %v126, 0
  %v129 = vperm.slane %v126, 1
  %v133 = vsel %vm48, %v108, 0
  %v136 = vsel %vm48, %v109, 0
  %138 = vmatpush.msra.mxu0 0.0
  %139 = vmatpush.msra.mxu0 0.0
  %140 = vmatpush.msra.mxu0 0.0
  %141 = vmatpush.msra.mxu0 0.0
  %142 = vmatpush.msra.mxu0 0.0
  %143 = vmatpush.msra.mxu0 0.0
  %144 = vmatpush.msra.mxu0 0.0
  %145 = vmatpush.msra.mxu0 0.0
  %146 = vmatpush.msra.mxu0 %v124
  %147 = vmatpush.msra.mxu0 %v122
  %148 = vmatpush.msra.mxu0 %v120
  %149 = vmatpush.msra.mxu0 %v118
  %150 = vmatpush.msra.mxu0 %v116
  %151 = vmatpush.msra.mxu0 %v114
  %152 = vmatpush.msra.mxu0 %v112
  %153 = vmatpush.msra.mxu0 %v110
  %154 = vmatmul.f32.gmra.mxu0 %v133
  %v155 = vpop.f32.mrf.mxu0
  %v156 = vadd.f32 %v128, %v155
  %157 = vmatmul.f32.gmra.mxu0 %v136
  %v158 = vpop.f32.mrf.mxu0
  %v159 = vadd.f32 %v128, %v158
  %160 = vdwg.mxu0
  %161 = vmatpush.msra.mxu0 0.0
  %162 = vmatpush.msra.mxu0 0.0
  %163 = vmatpush.msra.mxu0 0.0
  %164 = vmatpush.msra.mxu0 0.0
  %165 = vmatpush.msra.mxu0 0.0
  %166 = vmatpush.msra.mxu0 0.0
  %167 = vmatpush.msra.mxu0 0.0
  %168 = vmatpush.msra.mxu0 0.0
  %169 = vmatpush.msra.mxu0 %v125
  %170 = vmatpush.msra.mxu0 %v123
  %171 = vmatpush.msra.mxu0 %v121
  %172 = vmatpush.msra.mxu0 %v119
  %173 = vmatpush.msra.mxu0 %v117
  %174 = vmatpush.msra.mxu0 %v115
  %175 = vmatpush.msra.mxu0 %v113
  %176 = vmatpush.msra.mxu0 %v111
  %177 = vmatmul.f32.gmra.mxu0 %v133
  %v178 = vpop.f32.mrf.mxu0
  %v179 = vadd.f32 %v129, %v178
  %180 = vmatmul.f32.gmra.mxu0 %v136
  %v181 = vpop.f32.mrf.mxu0
  %v182 = vadd.f32 %v129, %v181
  %183 = vdwg.mxu0
  %v184 = vlaneseq
  %v185 = vand.u32 %v184, 127
  %vm186 = vcmp.lt.s32.totalorder %v185, 5
  %188 = vrot.lane.b32.xlu0 %v156, 64
  %v189 = vpop.permute.xlu0 %188
  %vm190 = vcmask 130048
  %v191 = vsel %vm190, %v156, 0
  %v193 = vsel %vm190, %v189, 0
  %195 = vmatpush.xpose.msra.mxu0 0.0
  %196 = vmatpush.xpose.msra.mxu0 0.0
  %197 = vmatpush.xpose.msra.mxu0 0.0
  %198 = vmatpush.xpose.msra.mxu0 0.0
  %199 = vmatpush.xpose.msra.mxu0 0.0
  %200 = vmatpush.xpose.msra.mxu0 0.0
  %201 = vmatpush.xpose.msra.mxu0 0.0
  %202 = vmatpush.xpose.msra.mxu0 0.0
  %203 = vmatpush.xpose.msra.mxu0 0.0
  %204 = vmatpush.xpose.msra.mxu0 0.0
  %205 = vmatpush.xpose.msra.mxu0 0.0
  %206 = vmatpush.xpose.msra.mxu0 0.0
  %207 = vmatpush.xpose.msra.mxu0 0.0
  %208 = vmatpush.xpose.msra.mxu0 0.0
  %209 = vmatpush.xpose.msra.mxu0 0.0
  %210 = vmatpush.xpose.msra.mxu0 %v193
  %211 = vmatmul.f32.gmra.mxu0 %v191
  %v212 = vpop.f32.mrf.mxu0
  %v213 = vadd.f32 0.0, %v212
  %214 = vdwg.mxu0
  %v215 = vmul.f32 %v213, 0.25
  %v216 = vsel %vm186, %v215, -1e+30
  %vm217 = vcmask 64512
  %v218 = vsel %vm217, %v216, -inf
  %219 = vmax.xlane.f32.xlu0 %v218
  %v220 = vpop.xlane.xlu0 %219
  %v221 = vsub.f32 %v216, %v220
  %v222 = vmul.f32 %v221, 1.442695
  %v223 = vpow.pop %v222
  %v224 = vsel %vm217, %v223, 0.0
  %225 = vadd.xlane.f32.xlu0 %v224
  %v226 = vpop.xlane.xlu0 %225
  %v227 = vrcp.pop %v226
  %v228 = vmul.f32 %v223, %v227
  %v230 = vsel %vm217, %v228, 0
  %232 = vmatpush.msra.mxu0 0.0
  %233 = vmatpush.msra.mxu0 0.0
  %234 = vmatpush.msra.mxu0 0.0
  %235 = vmatpush.msra.mxu0 0.0
  %236 = vmatpush.msra.mxu0 0.0
  %237 = vmatpush.msra.mxu0 0.0
  %238 = vmatpush.msra.mxu0 0.0
  %239 = vmatpush.msra.mxu0 0.0
  %240 = vmatpush.msra.mxu0 0.0
  %241 = vmatpush.msra.mxu0 0.0
  %242 = vmatpush.msra.mxu0 0.0
  %243 = vmatpush.msra.mxu0 0.0
  %244 = vmatpush.msra.mxu0 0.0
  %245 = vmatpush.msra.mxu0 0.0
  %246 = vmatpush.msra.mxu0 0.0
  %247 = vmatpush.msra.mxu0 %v179
  %248 = vmatmul.f32.gmra.mxu0 %v230
  %v249 = vpop.f32.mrf.mxu0
  %v250 = vadd.f32 0.0, %v249
  %251 = vdwg.mxu0
  %252 = vrot.lane.b32.xlu0 %v156, 112
  %v253 = vpop.permute.xlu0 %252
  %254 = vrot.lane.b32.xlu0 %v156, 48
  %v255 = vpop.permute.xlu0 %254
  %v256 = vsel %vm190, %v253, 0
  %v258 = vsel %vm190, %v255, 0
  %260 = vmatpush.xpose.msra.mxu0 0.0
  %261 = vmatpush.xpose.msra.mxu0 0.0
  %262 = vmatpush.xpose.msra.mxu0 0.0
  %263 = vmatpush.xpose.msra.mxu0 0.0
  %264 = vmatpush.xpose.msra.mxu0 0.0
  %265 = vmatpush.xpose.msra.mxu0 0.0
  %266 = vmatpush.xpose.msra.mxu0 0.0
  %267 = vmatpush.xpose.msra.mxu0 0.0
  %268 = vmatpush.xpose.msra.mxu0 0.0
  %269 = vmatpush.xpose.msra.mxu0 0.0
  %270 = vmatpush.xpose.msra.mxu0 0.0
  %271 = vmatpush.xpose.msra.mxu0 0.0
  %272 = vmatpush.xpose.msra.mxu0 0.0
  %273 = vmatpush.xpose.msra.mxu0 0.0
  %274 = vmatpush.xpose.msra.mxu0 0.0
  %275 = vmatpush.xpose.msra.mxu0 %v258
  %276 = vmatmul.f32.gmra.mxu0 %v256
  %v277 = vpop.f32.mrf.mxu0
  %v278 = vadd.f32 0.0, %v277
  %279 = vdwg.mxu0
  %v280 = vmul.f32 %v278, 0.25
  %v281 = vsel %vm186, %v280, -1e+30
  %v282 = vsel %vm217, %v281, -inf
  %283 = vmax.xlane.f32.xlu0 %v282
  %v284 = vpop.xlane.xlu0 %283
  %v285 = vsub.f32 %v281, %v284
  %v286 = vmul.f32 %v285, 1.442695
  %v287 = vpow.pop %v286
  %v288 = vsel %vm217, %v287, 0.0
  %289 = vadd.xlane.f32.xlu0 %v288
  %v290 = vpop.xlane.xlu0 %289
  %v291 = vrcp.pop %v290
  %v292 = vmul.f32 %v287, %v291
  %294 = vrot.lane.b32.xlu0 %v179, 112
  %v295 = vpop.permute.xlu0 %294
  %v298 = vsel %vm217, %v292, 0
  %300 = vmatpush.msra.mxu0 0.0
  %301 = vmatpush.msra.mxu0 0.0
  %302 = vmatpush.msra.mxu0 0.0
  %303 = vmatpush.msra.mxu0 0.0
  %304 = vmatpush.msra.mxu0 0.0
  %305 = vmatpush.msra.mxu0 0.0
  %306 = vmatpush.msra.mxu0 0.0
  %307 = vmatpush.msra.mxu0 0.0
  %308 = vmatpush.msra.mxu0 0.0
  %309 = vmatpush.msra.mxu0 0.0
  %310 = vmatpush.msra.mxu0 0.0
  %311 = vmatpush.msra.mxu0 0.0
  %312 = vmatpush.msra.mxu0 0.0
  %313 = vmatpush.msra.mxu0 0.0
  %314 = vmatpush.msra.mxu0 0.0
  %315 = vmatpush.msra.mxu0 %v295
  %316 = vmatmul.f32.gmra.mxu0 %v298
  %v317 = vpop.f32.mrf.mxu0
  %v318 = vadd.f32 0.0, %v317
  %319 = vdwg.mxu0
  %320 = vrot.lane.b32.xlu0 %v156, 96
  %v321 = vpop.permute.xlu0 %320
  %322 = vrot.lane.b32.xlu0 %v156, 32
  %v323 = vpop.permute.xlu0 %322
  %v324 = vsel %vm190, %v321, 0
  %v326 = vsel %vm190, %v323, 0
  %328 = vmatpush.xpose.msra.mxu0 0.0
  %329 = vmatpush.xpose.msra.mxu0 0.0
  %330 = vmatpush.xpose.msra.mxu0 0.0
  %331 = vmatpush.xpose.msra.mxu0 0.0
  %332 = vmatpush.xpose.msra.mxu0 0.0
  %333 = vmatpush.xpose.msra.mxu0 0.0
  %334 = vmatpush.xpose.msra.mxu0 0.0
  %335 = vmatpush.xpose.msra.mxu0 0.0
  %336 = vmatpush.xpose.msra.mxu0 0.0
  %337 = vmatpush.xpose.msra.mxu0 0.0
  %338 = vmatpush.xpose.msra.mxu0 0.0
  %339 = vmatpush.xpose.msra.mxu0 0.0
  %340 = vmatpush.xpose.msra.mxu0 0.0
  %341 = vmatpush.xpose.msra.mxu0 0.0
  %342 = vmatpush.xpose.msra.mxu0 0.0
  %343 = vmatpush.xpose.msra.mxu0 %v326
  %344 = vmatmul.f32.gmra.mxu0 %v324
  %v345 = vpop.f32.mrf.mxu0
  %v346 = vadd.f32 0.0, %v345
  %347 = vdwg.mxu0
  %v348 = vmul.f32 %v346, 0.25
  %v349 = vsel %vm186, %v348, -1e+30
  %v350 = vsel %vm217, %v349, -inf
  %351 = vmax.xlane.f32.xlu0 %v350
  %v352 = vpop.xlane.xlu0 %351
  %v353 = vsub.f32 %v349, %v352
  %v354 = vmul.f32 %v353, 1.442695
  %v355 = vpow.pop %v354
  %v356 = vsel %vm217, %v355, 0.0
  %357 = vadd.xlane.f32.xlu0 %v356
  %v358 = vpop.xlane.xlu0 %357
  %v359 = vrcp.pop %v358
  %v360 = vmul.f32 %v355, %v359
  %361 = vrot.lane.b32.xlu0 %v179, 96
  %v362 = vpop.permute.xlu0 %361
  %v365 = vsel %vm217, %v360, 0
  %367 = vmatpush.msra.mxu0 0.0
  %368 = vmatpush.msra.mxu0 0.0
  %369 = vmatpush.msra.mxu0 0.0
  %370 = vmatpush.msra.mxu0 0.0
  %371 = vmatpush.msra.mxu0 0.0
  %372 = vmatpush.msra.mxu0 0.0
  %373 = vmatpush.msra.mxu0 0.0
  %374 = vmatpush.msra.mxu0 0.0
  %375 = vmatpush.msra.mxu0 0.0
  %376 = vmatpush.msra.mxu0 0.0
  %377 = vmatpush.msra.mxu0 0.0
  %378 = vmatpush.msra.mxu0 0.0
  %379 = vmatpush.msra.mxu0 0.0
  %380 = vmatpush.msra.mxu0 0.0
  %381 = vmatpush.msra.mxu0 0.0
  %382 = vmatpush.msra.mxu0 %v362
  %383 = vmatmul.f32.gmra.mxu0 %v365
  %v384 = vpop.f32.mrf.mxu0
  %v385 = vadd.f32 0.0, %v384
  %386 = vdwg.mxu0
  %387 = vrot.lane.b32.xlu0 %v156, 80
  %v388 = vpop.permute.xlu0 %387
  %389 = vrot.lane.b32.xlu0 %v156, 16
  %v390 = vpop.permute.xlu0 %389
  %v391 = vsel %vm190, %v388, 0
  %v393 = vsel %vm190, %v390, 0
  %395 = vmatpush.xpose.msra.mxu0 0.0
  %396 = vmatpush.xpose.msra.mxu0 0.0
  %397 = vmatpush.xpose.msra.mxu0 0.0
  %398 = vmatpush.xpose.msra.mxu0 0.0
  %399 = vmatpush.xpose.msra.mxu0 0.0
  %400 = vmatpush.xpose.msra.mxu0 0.0
  %401 = vmatpush.xpose.msra.mxu0 0.0
  %402 = vmatpush.xpose.msra.mxu0 0.0
  %403 = vmatpush.xpose.msra.mxu0 0.0
  %404 = vmatpush.xpose.msra.mxu0 0.0
  %405 = vmatpush.xpose.msra.mxu0 0.0
  %406 = vmatpush.xpose.msra.mxu0 0.0
  %407 = vmatpush.xpose.msra.mxu0 0.0
  %408 = vmatpush.xpose.msra.mxu0 0.0
  %409 = vmatpush.xpose.msra.mxu0 0.0
  %410 = vmatpush.xpose.msra.mxu0 %v393
  %411 = vmatmul.f32.gmra.mxu0 %v391
  %v412 = vpop.f32.mrf.mxu0
  %v413 = vadd.f32 0.0, %v412
  %414 = vdwg.mxu0
  %v415 = vmul.f32 %v413, 0.25
  %v416 = vsel %vm186, %v415, -1e+30
  %v417 = vsel %vm217, %v416, -inf
  %418 = vmax.xlane.f32.xlu0 %v417
  %v419 = vpop.xlane.xlu0 %418
  %v420 = vsub.f32 %v416, %v419
  %v421 = vmul.f32 %v420, 1.442695
  %v422 = vpow.pop %v421
  %v423 = vsel %vm217, %v422, 0.0
  %424 = vadd.xlane.f32.xlu0 %v423
  %v425 = vpop.xlane.xlu0 %424
  %v426 = vrcp.pop %v425
  %v427 = vmul.f32 %v422, %v426
  %428 = vrot.lane.b32.xlu0 %v179, 80
  %v429 = vpop.permute.xlu0 %428
  %v432 = vsel %vm217, %v427, 0
  %434 = vmatpush.msra.mxu0 0.0
  %435 = vmatpush.msra.mxu0 0.0
  %436 = vmatpush.msra.mxu0 0.0
  %437 = vmatpush.msra.mxu0 0.0
  %438 = vmatpush.msra.mxu0 0.0
  %439 = vmatpush.msra.mxu0 0.0
  %440 = vmatpush.msra.mxu0 0.0
  %441 = vmatpush.msra.mxu0 0.0
  %442 = vmatpush.msra.mxu0 0.0
  %443 = vmatpush.msra.mxu0 0.0
  %444 = vmatpush.msra.mxu0 0.0
  %445 = vmatpush.msra.mxu0 0.0
  %446 = vmatpush.msra.mxu0 0.0
  %447 = vmatpush.msra.mxu0 0.0
  %448 = vmatpush.msra.mxu0 0.0
  %449 = vmatpush.msra.mxu0 %v429
  %450 = vmatmul.f32.gmra.mxu0 %v432
  %v451 = vpop.f32.mrf.mxu0
  %v452 = vadd.f32 0.0, %v451
  %453 = vdwg.mxu0
  %455 = vrot.lane.b32.xlu0 %v318, 16
  %v456 = vpop.permute.xlu0 %455
  %459 = vrot.lane.b32.xlu0 %v385, 32
  %v460 = vpop.permute.xlu0 %459
  %463 = vrot.lane.b32.xlu0 %v452, 48
  %v464 = vpop.permute.xlu0 %463
  %v466 = vsel %vm190, %v250, %v456
  %vm467 = vcmask 261120
  %v468 = vsel %vm467, %v466, %v460
  %vm469 = vcmask 392192
  %v470 = vsel %vm469, %v468, %v464
  %472 = vrot.lane.b32.xlu0 %v159, 64
  %v473 = vpop.permute.xlu0 %472
  %v474 = vsel %vm190, %v159, 0
  %v476 = vsel %vm190, %v473, 0
  %478 = vmatpush.xpose.msra.mxu0 0.0
  %479 = vmatpush.xpose.msra.mxu0 0.0
  %480 = vmatpush.xpose.msra.mxu0 0.0
  %481 = vmatpush.xpose.msra.mxu0 0.0
  %482 = vmatpush.xpose.msra.mxu0 0.0
  %483 = vmatpush.xpose.msra.mxu0 0.0
  %484 = vmatpush.xpose.msra.mxu0 0.0
  %485 = vmatpush.xpose.msra.mxu0 0.0
  %486 = vmatpush.xpose.msra.mxu0 0.0
  %487 = vmatpush.xpose.msra.mxu0 0.0
  %488 = vmatpush.xpose.msra.mxu0 0.0
  %489 = vmatpush.xpose.msra.mxu0 0.0
  %490 = vmatpush.xpose.msra.mxu0 0.0
  %491 = vmatpush.xpose.msra.mxu0 0.0
  %492 = vmatpush.xpose.msra.mxu0 0.0
  %493 = vmatpush.xpose.msra.mxu0 %v476
  %494 = vmatmul.f32.gmra.mxu0 %v474
  %v495 = vpop.f32.mrf.mxu0
  %v496 = vadd.f32 0.0, %v495
  %497 = vdwg.mxu0
  %v498 = vmul.f32 %v496, 0.25
  %v499 = vsel %vm186, %v498, -1e+30
  %v500 = vsel %vm217, %v499, -inf
  %501 = vmax.xlane.f32.xlu0 %v500
  %v502 = vpop.xlane.xlu0 %501
  %v503 = vsub.f32 %v499, %v502
  %v504 = vmul.f32 %v503, 1.442695
  %v505 = vpow.pop %v504
  %v506 = vsel %vm217, %v505, 0.0
  %507 = vadd.xlane.f32.xlu0 %v506
  %v508 = vpop.xlane.xlu0 %507
  %v509 = vrcp.pop %v508
  %v510 = vmul.f32 %v505, %v509
  %v512 = vsel %vm217, %v510, 0
  %514 = vmatpush.msra.mxu0 0.0
  %515 = vmatpush.msra.mxu0 0.0
  %516 = vmatpush.msra.mxu0 0.0
  %517 = vmatpush.msra.mxu0 0.0
  %518 = vmatpush.msra.mxu0 0.0
  %519 = vmatpush.msra.mxu0 0.0
  %520 = vmatpush.msra.mxu0 0.0
  %521 = vmatpush.msra.mxu0 0.0
  %522 = vmatpush.msra.mxu0 0.0
  %523 = vmatpush.msra.mxu0 0.0
  %524 = vmatpush.msra.mxu0 0.0
  %525 = vmatpush.msra.mxu0 0.0
  %526 = vmatpush.msra.mxu0 0.0
  %527 = vmatpush.msra.mxu0 0.0
  %528 = vmatpush.msra.mxu0 0.0
  %529 = vmatpush.msra.mxu0 %v182
  %530 = vmatmul.f32.gmra.mxu0 %v512
  %v531 = vpop.f32.mrf.mxu0
  %v532 = vadd.f32 0.0, %v531
  %533 = vdwg.mxu0
  %534 = vrot.lane.b32.xlu0 %v159, 112
  %v535 = vpop.permute.xlu0 %534
  %536 = vrot.lane.b32.xlu0 %v159, 48
  %v537 = vpop.permute.xlu0 %536
  %v538 = vsel %vm190, %v535, 0
  %v540 = vsel %vm190, %v537, 0
  %542 = vmatpush.xpose.msra.mxu0 0.0
  %543 = vmatpush.xpose.msra.mxu0 0.0
  %544 = vmatpush.xpose.msra.mxu0 0.0
  %545 = vmatpush.xpose.msra.mxu0 0.0
  %546 = vmatpush.xpose.msra.mxu0 0.0
  %547 = vmatpush.xpose.msra.mxu0 0.0
  %548 = vmatpush.xpose.msra.mxu0 0.0
  %549 = vmatpush.xpose.msra.mxu0 0.0
  %550 = vmatpush.xpose.msra.mxu0 0.0
  %551 = vmatpush.xpose.msra.mxu0 0.0
  %552 = vmatpush.xpose.msra.mxu0 0.0
  %553 = vmatpush.xpose.msra.mxu0 0.0
  %554 = vmatpush.xpose.msra.mxu0 0.0
  %555 = vmatpush.xpose.msra.mxu0 0.0
  %556 = vmatpush.xpose.msra.mxu0 0.0
  %557 = vmatpush.xpose.msra.mxu0 %v540
  %558 = vmatmul.f32.gmra.mxu0 %v538
  %v559 = vpop.f32.mrf.mxu0
  %v560 = vadd.f32 0.0, %v559
  %561 = vdwg.mxu0
  %v562 = vmul.f32 %v560, 0.25
  %v563 = vsel %vm186, %v562, -1e+30
  %v564 = vsel %vm217, %v563, -inf
  %565 = vmax.xlane.f32.xlu0 %v564
  %v566 = vpop.xlane.xlu0 %565
  %v567 = vsub.f32 %v563, %v566
  %v568 = vmul.f32 %v567, 1.442695
  %v569 = vpow.pop %v568
  %v570 = vsel %vm217, %v569, 0.0
  %571 = vadd.xlane.f32.xlu0 %v570
  %v572 = vpop.xlane.xlu0 %571
  %v573 = vrcp.pop %v572
  %v574 = vmul.f32 %v569, %v573
  %576 = vrot.lane.b32.xlu0 %v182, 112
  %v577 = vpop.permute.xlu0 %576
  %v580 = vsel %vm217, %v574, 0
  %582 = vmatpush.msra.mxu0 0.0
  %583 = vmatpush.msra.mxu0 0.0
  %584 = vmatpush.msra.mxu0 0.0
  %585 = vmatpush.msra.mxu0 0.0
  %586 = vmatpush.msra.mxu0 0.0
  %587 = vmatpush.msra.mxu0 0.0
  %588 = vmatpush.msra.mxu0 0.0
  %589 = vmatpush.msra.mxu0 0.0
  %590 = vmatpush.msra.mxu0 0.0
  %591 = vmatpush.msra.mxu0 0.0
  %592 = vmatpush.msra.mxu0 0.0
  %593 = vmatpush.msra.mxu0 0.0
  %594 = vmatpush.msra.mxu0 0.0
  %595 = vmatpush.msra.mxu0 0.0
  %596 = vmatpush.msra.mxu0 0.0
  %597 = vmatpush.msra.mxu0 %v577
  %598 = vmatmul.f32.gmra.mxu0 %v580
  %v599 = vpop.f32.mrf.mxu0
  %v600 = vadd.f32 0.0, %v599
  %601 = vdwg.mxu0
  %602 = vrot.lane.b32.xlu0 %v159, 96
  %v603 = vpop.permute.xlu0 %602
  %604 = vrot.lane.b32.xlu0 %v159, 32
  %v605 = vpop.permute.xlu0 %604
  %v606 = vsel %vm190, %v603, 0
  %v608 = vsel %vm190, %v605, 0
  %610 = vmatpush.xpose.msra.mxu0 0.0
  %611 = vmatpush.xpose.msra.mxu0 0.0
  %612 = vmatpush.xpose.msra.mxu0 0.0
  %613 = vmatpush.xpose.msra.mxu0 0.0
  %614 = vmatpush.xpose.msra.mxu0 0.0
  %615 = vmatpush.xpose.msra.mxu0 0.0
  %616 = vmatpush.xpose.msra.mxu0 0.0
  %617 = vmatpush.xpose.msra.mxu0 0.0
  %618 = vmatpush.xpose.msra.mxu0 0.0
  %619 = vmatpush.xpose.msra.mxu0 0.0
  %620 = vmatpush.xpose.msra.mxu0 0.0
  %621 = vmatpush.xpose.msra.mxu0 0.0
  %622 = vmatpush.xpose.msra.mxu0 0.0
  %623 = vmatpush.xpose.msra.mxu0 0.0
  %624 = vmatpush.xpose.msra.mxu0 0.0
  %625 = vmatpush.xpose.msra.mxu0 %v608
  %626 = vmatmul.f32.gmra.mxu0 %v606
  %v627 = vpop.f32.mrf.mxu0
  %v628 = vadd.f32 0.0, %v627
  %629 = vdwg.mxu0
  %v630 = vmul.f32 %v628, 0.25
  %v631 = vsel %vm186, %v630, -1e+30
  %v632 = vsel %vm217, %v631, -inf
  %633 = vmax.xlane.f32.xlu0 %v632
  %v634 = vpop.xlane.xlu0 %633
  %v635 = vsub.f32 %v631, %v634
  %v636 = vmul.f32 %v635, 1.442695
  %v637 = vpow.pop %v636
  %v638 = vsel %vm217, %v637, 0.0
  %639 = vadd.xlane.f32.xlu0 %v638
  %v640 = vpop.xlane.xlu0 %639
  %v641 = vrcp.pop %v640
  %v642 = vmul.f32 %v637, %v641
  %643 = vrot.lane.b32.xlu0 %v182, 96
  %v644 = vpop.permute.xlu0 %643
  %v647 = vsel %vm217, %v642, 0
  %649 = vmatpush.msra.mxu0 0.0
  %650 = vmatpush.msra.mxu0 0.0
  %651 = vmatpush.msra.mxu0 0.0
  %652 = vmatpush.msra.mxu0 0.0
  %653 = vmatpush.msra.mxu0 0.0
  %654 = vmatpush.msra.mxu0 0.0
  %655 = vmatpush.msra.mxu0 0.0
  %656 = vmatpush.msra.mxu0 0.0
  %657 = vmatpush.msra.mxu0 0.0
  %658 = vmatpush.msra.mxu0 0.0
  %659 = vmatpush.msra.mxu0 0.0
  %660 = vmatpush.msra.mxu0 0.0
  %661 = vmatpush.msra.mxu0 0.0
  %662 = vmatpush.msra.mxu0 0.0
  %663 = vmatpush.msra.mxu0 0.0
  %664 = vmatpush.msra.mxu0 %v644
  %665 = vmatmul.f32.gmra.mxu0 %v647
  %v666 = vpop.f32.mrf.mxu0
  %v667 = vadd.f32 0.0, %v666
  %668 = vdwg.mxu0
  %669 = vrot.lane.b32.xlu0 %v159, 80
  %v670 = vpop.permute.xlu0 %669
  %671 = vrot.lane.b32.xlu0 %v159, 16
  %v672 = vpop.permute.xlu0 %671
  %v673 = vsel %vm190, %v670, 0
  %v675 = vsel %vm190, %v672, 0
  %677 = vmatpush.xpose.msra.mxu0 0.0
  %678 = vmatpush.xpose.msra.mxu0 0.0
  %679 = vmatpush.xpose.msra.mxu0 0.0
  %680 = vmatpush.xpose.msra.mxu0 0.0
  %681 = vmatpush.xpose.msra.mxu0 0.0
  %682 = vmatpush.xpose.msra.mxu0 0.0
  %683 = vmatpush.xpose.msra.mxu0 0.0
  %684 = vmatpush.xpose.msra.mxu0 0.0
  %685 = vmatpush.xpose.msra.mxu0 0.0
  %686 = vmatpush.xpose.msra.mxu0 0.0
  %687 = vmatpush.xpose.msra.mxu0 0.0
  %688 = vmatpush.xpose.msra.mxu0 0.0
  %689 = vmatpush.xpose.msra.mxu0 0.0
  %690 = vmatpush.xpose.msra.mxu0 0.0
  %691 = vmatpush.xpose.msra.mxu0 0.0
  %692 = vmatpush.xpose.msra.mxu0 %v675
  %693 = vmatmul.f32.gmra.mxu0 %v673
  %v694 = vpop.f32.mrf.mxu0
  %v695 = vadd.f32 0.0, %v694
  %696 = vdwg.mxu0
  %v697 = vmul.f32 %v695, 0.25
  %v698 = vsel %vm186, %v697, -1e+30
  %v699 = vsel %vm217, %v698, -inf
  %700 = vmax.xlane.f32.xlu0 %v699
  %v701 = vpop.xlane.xlu0 %700
  %v702 = vsub.f32 %v698, %v701
  %v703 = vmul.f32 %v702, 1.442695
  %v704 = vpow.pop %v703
  %v705 = vsel %vm217, %v704, 0.0
  %706 = vadd.xlane.f32.xlu0 %v705
  %v707 = vpop.xlane.xlu0 %706
  %v708 = vrcp.pop %v707
  %v709 = vmul.f32 %v704, %v708
  %710 = vrot.lane.b32.xlu0 %v182, 80
  %v711 = vpop.permute.xlu0 %710
  %v714 = vsel %vm217, %v709, 0
  %716 = vmatpush.msra.mxu0 0.0
  %717 = vmatpush.msra.mxu0 0.0
  %718 = vmatpush.msra.mxu0 0.0
  %719 = vmatpush.msra.mxu0 0.0
  %720 = vmatpush.msra.mxu0 0.0
  %721 = vmatpush.msra.mxu0 0.0
  %722 = vmatpush.msra.mxu0 0.0
  %723 = vmatpush.msra.mxu0 0.0
  %724 = vmatpush.msra.mxu0 0.0
  %725 = vmatpush.msra.mxu0 0.0
  %726 = vmatpush.msra.mxu0 0.0
  %727 = vmatpush.msra.mxu0 0.0
  %728 = vmatpush.msra.mxu0 0.0
  %729 = vmatpush.msra.mxu0 0.0
  %730 = vmatpush.msra.mxu0 0.0
  %731 = vmatpush.msra.mxu0 %v711
  %732 = vmatmul.f32.gmra.mxu0 %v714
  %v733 = vpop.f32.mrf.mxu0
  %v734 = vadd.f32 0.0, %v733
  %735 = vdwg.mxu0
  %737 = vrot.lane.b32.xlu0 %v600, 16
  %v738 = vpop.permute.xlu0 %737
  %741 = vrot.lane.b32.xlu0 %v667, 32
  %v742 = vpop.permute.xlu0 %741
  %745 = vrot.lane.b32.xlu0 %v734, 48
  %v746 = vpop.permute.xlu0 %745
  %v748 = vsel %vm190, %v532, %v738
  %v749 = vsel %vm467, %v748, %v742
  %v750 = vsel %vm469, %v749, %v746
  %v751 = vld [vmem:[%s5] sm:$0xff]
  %v752 = vld [vmem:[%s5 + $0x8] sm:$0xff]
  %v753 = vld [vmem:[%s5 + $0x10] sm:$0xff]
  %v754 = vld [vmem:[%s5 + $0x18] sm:$0xff]
  %v755 = vld [vmem:[%s5 + $0x20] sm:$0xff]
  %v756 = vld [vmem:[%s5 + $0x28] sm:$0xff]
  %v757 = vld [vmem:[%s5 + $0x30] sm:$0xff]
  %v758 = vld [vmem:[%s5 + $0x38] sm:$0xff]
  %v760 = vsel %vm48, %v470, 0
  %v763 = vsel %vm48, %v750, 0
  %765 = vmatpush.msra.mxu0 0.0
  %766 = vmatpush.msra.mxu0 0.0
  %767 = vmatpush.msra.mxu0 0.0
  %768 = vmatpush.msra.mxu0 0.0
  %769 = vmatpush.msra.mxu0 0.0
  %770 = vmatpush.msra.mxu0 0.0
  %771 = vmatpush.msra.mxu0 0.0
  %772 = vmatpush.msra.mxu0 0.0
  %773 = vmatpush.msra.mxu0 %v758
  %774 = vmatpush.msra.mxu0 %v757
  %775 = vmatpush.msra.mxu0 %v756
  %776 = vmatpush.msra.mxu0 %v755
  %777 = vmatpush.msra.mxu0 %v754
  %778 = vmatpush.msra.mxu0 %v753
  %779 = vmatpush.msra.mxu0 %v752
  %780 = vmatpush.msra.mxu0 %v751
  %781 = vmatmul.f32.gmra.mxu0 %v760
  %v782 = vpop.f32.mrf.mxu0
  %v783 = vadd.f32 0.0, %v782
  %784 = vmatmul.f32.gmra.mxu0 %v763
  %v785 = vpop.f32.mrf.mxu0
  %v786 = vadd.f32 0.0, %v785
  %787 = vdwg.mxu0
  %v788 = vadd.f32 %v44, %v783
  %v789 = vadd.f32 %v45, %v786
  %v790 = vld [vmem:[%s6] sm:$0x1]
  %v792 = vperm.slane %v790, 0
  %v794 = vadd.f32 %v788, %v792
  %v795 = vadd.f32 %v789, %v792
  %v796 = vld [vmem:[%s7] sm:$0x1]
  %v797 = vld [vmem:[%s8] sm:$0x1]
  %v798 = vsel %vm48, %v794, 0.0
  %799 = vadd.xlane.f32.xlu0 %v798
  %v800 = vpop.xlane.xlu0 %799
  %v801 = vsel %vm48, %v795, 0.0
  %802 = vadd.xlane.f32.xlu0 %v801
  %v803 = vpop.xlane.xlu0 %802
  %v804 = vmul.f32 %v800, %v61
  %v805 = vmul.f32 %v803, %v61
  %v806 = vsub.f32 %v794, %v804
  %v807 = vsub.f32 %v795, %v805
  %v808 = vmul.f32 %v806, %v806
  %v809 = vmul.f32 %v807, %v807
  %v810 = vsel %vm48, %v808, 0.0
  %811 = vadd.xlane.f32.xlu0 %v810
  %v812 = vpop.xlane.xlu0 %811
  %v813 = vsel %vm48, %v809, 0.0
  %814 = vadd.xlane.f32.xlu0 %v813
  %v815 = vpop.xlane.xlu0 %814
  %v816 = vmul.f32 %v812, %v61
  %v817 = vmul.f32 %v815, %v61
  %v818 = vadd.f32 %v816, 1e-06
  %v819 = vadd.f32 %v817, 1e-06
  %v820 = vrsqrt.pop %v818
  %v821 = vmul.f32 %v820, %v818
  %v822 = vmul.f32 %v821, %v820
  %v823 = vmul.f32 0.5, %v822
  %v824 = vsub.f32 1.5, %v823
  %v825 = vmul.f32 %v820, %v824
  %vm826 = vweird.f32 %v818
  %vm827 = vweird.f32 %v820
  %vm828 = vmor %vm826, %vm827
  %v829 = vsel %vm828, %v820, %v825
  %v830 = vrsqrt.pop %v819
  %v831 = vmul.f32 %v830, %v819
  %v832 = vmul.f32 %v831, %v830
  %v833 = vmul.f32 0.5, %v832
  %v834 = vsub.f32 1.5, %v833
  %v835 = vmul.f32 %v830, %v834
  %vm836 = vweird.f32 %v819
  %vm837 = vweird.f32 %v830
  %vm838 = vmor %vm836, %vm837
  %v839 = vsel %vm838, %v830, %v835
  %v840 = vmul.f32 %v806, %v829
  %v841 = vmul.f32 %v807, %v839
  %v843 = vperm.slane %v796, 0
  %v845 = vmul.f32 %v840, %v843
  %v846 = vmul.f32 %v841, %v843
  %v848 = vperm.slane %v797, 0
  %v850 = vadd.f32 %v845, %v848
  %v851 = vadd.f32 %v846, %v848
  %v852 = vld [vmem:[%s9] sm:$0xff]
  %v853 = vld [vmem:[%s9 + $0x8] sm:$0xff]
  %v854 = vld [vmem:[%s9 + $0x10] sm:$0xff]
  %v855 = vld [vmem:[%s9 + $0x18] sm:$0xff]
  %v856 = vld [vmem:[%s9 + $0x20] sm:$0xff]
  %v857 = vld [vmem:[%s9 + $0x28] sm:$0xff]
  %v858 = vld [vmem:[%s9 + $0x30] sm:$0xff]
  %v859 = vld [vmem:[%s9 + $0x38] sm:$0xff]
  %v860 = vld [vmem:[%s10] sm:$0x1]
  %v862 = vperm.slane %v860, 0
  %v865 = vsel %vm48, %v850, 0
  %v868 = vsel %vm48, %v851, 0
  %870 = vmatpush.msra.mxu0 0.0
  %871 = vmatpush.msra.mxu0 0.0
  %872 = vmatpush.msra.mxu0 0.0
  %873 = vmatpush.msra.mxu0 0.0
  %874 = vmatpush.msra.mxu0 0.0
  %875 = vmatpush.msra.mxu0 0.0
  %876 = vmatpush.msra.mxu0 0.0
  %877 = vmatpush.msra.mxu0 0.0
  %878 = vmatpush.msra.mxu0 %v859
  %879 = vmatpush.msra.mxu0 %v858
  %880 = vmatpush.msra.mxu0 %v857
  %881 = vmatpush.msra.mxu0 %v856
  %882 = vmatpush.msra.mxu0 %v855
  %883 = vmatpush.msra.mxu0 %v854
  %884 = vmatpush.msra.mxu0 %v853
  %885 = vmatpush.msra.mxu0 %v852
  %886 = vmatmul.f32.gmra.mxu0 %v865
  %v887 = vpop.f32.mrf.mxu0
  %v888 = vadd.f32 %v862, %v887
  %889 = vmatmul.f32.gmra.mxu0 %v868
  %v890 = vpop.f32.mrf.mxu0
  %v891 = vadd.f32 %v862, %v890
  %892 = vdwg.mxu0
  %v893 = vmul.f32 %v888, 0.5
  %v894 = vmul.f32 %v891, 0.5
  %v895 = vmul.f32 %v888, 0.044715
  %v896 = vmul.f32 %v891, 0.044715
  %v897 = vmul.f32 %v895, %v888
  %v898 = vmul.f32 %v896, %v891
  %v899 = vmul.f32 %v897, %v888
  %v900 = vmul.f32 %v898, %v891
  %v901 = vadd.f32 %v888, %v899
  %v902 = vadd.f32 %v891, %v900
  %v903 = vmul.f32 %v901, 0.7978846
  %v904 = vmul.f32 %v902, 0.7978846
  %v905 = vtanh.pop %v903
  %v906 = vtanh.pop %v904
  %v907 = vadd.f32 %v905, 1.0
  %v908 = vadd.f32 %v906, 1.0
  %v909 = vmul.f32 %v893, %v907
  %v910 = vmul.f32 %v894, %v908
  %v911 = vld [vmem:[%s11] sm:$0xff]
  %v912 = vld [vmem:[%s11 + $0x8] sm:$0xff]
  %v913 = vld [vmem:[%s11 + $0x10] sm:$0xff]
  %v914 = vld [vmem:[%s11 + $0x18] sm:$0xff]
  %v915 = vld [vmem:[%s11 + $0x20] sm:$0xff]
  %v916 = vld [vmem:[%s11 + $0x28] sm:$0xff]
  %v917 = vld [vmem:[%s11 + $0x30] sm:$0xff]
  %v918 = vld [vmem:[%s11 + $0x38] sm:$0xff]
  %v919 = vld [vmem:[%s11 + $0x40] sm:$0xff]
  %v920 = vld [vmem:[%s11 + $0x48] sm:$0xff]
  %v921 = vld [vmem:[%s11 + $0x50] sm:$0xff]
  %v922 = vld [vmem:[%s11 + $0x58] sm:$0xff]
  %v923 = vld [vmem:[%s11 + $0x60] sm:$0xff]
  %v924 = vld [vmem:[%s11 + $0x68] sm:$0xff]
  %v925 = vld [vmem:[%s11 + $0x70] sm:$0xff]
  %v926 = vld [vmem:[%s11 + $0x78] sm:$0xff]
  %927 = vmatpush.msra.mxu0 %v926
  %928 = vmatpush.msra.mxu0 %v925
  %929 = vmatpush.msra.mxu0 %v924
  %930 = vmatpush.msra.mxu0 %v923
  %931 = vmatpush.msra.mxu0 %v922
  %932 = vmatpush.msra.mxu0 %v921
  %933 = vmatpush.msra.mxu0 %v920
  %934 = vmatpush.msra.mxu0 %v919
  %935 = vmatpush.msra.mxu0 %v918
  %936 = vmatpush.msra.mxu0 %v917
  %937 = vmatpush.msra.mxu0 %v916
  %938 = vmatpush.msra.mxu0 %v915
  %939 = vmatpush.msra.mxu0 %v914
  %940 = vmatpush.msra.mxu0 %v913
  %941 = vmatpush.msra.mxu0 %v912
  %942 = vmatpush.msra.mxu0 %v911
  %943 = vmatmul.f32.gmra.mxu0 %v909
  %v944 = vpop.f32.mrf.mxu0
  %v945 = vadd.f32 0.0, %v944
  %946 = vmatmul.f32.gmra.mxu0 %v910
  %v947 = vpop.f32.mrf.mxu0
  %v948 = vadd.f32 0.0, %v947
  %949 = vdwg.mxu0
  %v950 = vadd.f32 %v794, %v945
  %v951 = vadd.f32 %v795, %v948
  %v952 = vld [vmem:[%s12] sm:$0x1]
  %v954 = vperm.slane %v952, 0
  %v956 = vadd.f32 %v950, %v954
  %v957 = vadd.f32 %v951, %v954
  %958 = vst.msk [vmem:[%s13] sm:$0xff] %vm48, %v956
  %959 = vst.msk [vmem:[%s13 + $0x8] sm:$0xff] %vm48, %v957
  // Predicated region
  $region54: #{_lambda_.5} parent=0 // pred_check
    _
  $region55: #{_lambda_.5} parent=0 // pred_check_branch
    %961 = sbr.rel (0) target = $region57
  $region56: #{_lambda_.5} parent=0 // pred_region
    _
  $region57: #{_lambda_.5} parent=0 // pred_fallthru
    _
  // Predicated region
  $region58: #{_lambda_.5} parent=0 // pred_check
    _
  $region59: #{_lambda_.5} parent=0 // pred_check_branch
    %963 = sbr.rel (0) target = $region61
  $region60: #{_lambda_.5} parent=0 // pred_region
    _
  $region61: #{_lambda_.5} parent=0 // pred_fallthru
    _

</llo_original>
